<compile_context>
chip_gen: v5e
topology: v5e:2x2
jax: 0.10.0
libtpu: 0.0.40
codegen_flags: <defaults>
</compile_context>

<pallas_src>
import functools

import jax
import jax.numpy as jnp
from jax import lax
from jax.experimental import pallas as pl
from jax.experimental.pallas import tpu as pltpu

SCALE_FACTOR = 1.0   # Model(scale_factor=1): torch divides qk by it
DROPOUT_P = 0.0      # Model(dropout_p=0): dropout is an identity
# TODO(synk): dropout_p > 0 is not implemented (module instantiates p=0 -> no-op).


def _attn_kernel(q_ref, kt_ref, v_ref, o_ref, *, scale_factor, blk):
    # q_ref: (blk, Sq, D), kt_ref: (blk, D, Sk), v_ref: (blk, Sk, D),
    # o_ref: (blk, Sq, D).  One head at a time keeps live vregs bounded.
    inv_scale = 1.0 / float(scale_factor)

    def per_head(h, carry):
        q = q_ref[h]                                            # (Sq, D)
        if scale_factor != 1.0:                                 # trace-time elision
            q = q * inv_scale                                   # == qk.div(scale_factor)
        # QK^T, NN-shaped (K was pre-transposed in the wrapper).
        s = jnp.dot(q, kt_ref[h], preferred_element_type=jnp.float32)   # (Sq, Sk)
        # Numerically stable, *exact* softmax over the last dim.
        m = jnp.max(s, axis=-1, keepdims=True)
        p = jnp.exp(s - m)
        p = p / jnp.sum(p, axis=-1, keepdims=True)
        # dropout(p=0) is identity; PV matmul (NN).
        out = jnp.dot(p.astype(v_ref.dtype), v_ref[h],
                      preferred_element_type=jnp.float32)               # (Sq, D)
        o_ref[h] = out.astype(o_ref.dtype)
        return carry

    lax.fori_loop(0, blk, per_head, 0, unroll=True)


def _tensorcores_per_chip():
    # v7x has 2 TensorCores per chip; v5e/v6e (and CPU interpret) have 1.
    try:
        kind = jax.devices()[0].device_kind.lower()
    except Exception:
        return 1
    return 2 if ("v7" in kind or "7x" in kind) else 1


def scaled_dot_product_attention(query, key, value, scale_factor=SCALE_FACTOR):
    # query: (B, H, Sq, D); key/value: (B, H, Sk, D)
    B, H, Sq, D = query.shape
    Sk = key.shape[2]
    BH = B * H

    q = query.reshape(BH, Sq, D)
    # Pre-transpose K in XLA (tiny tensor, fuses with the reshape) so the
    # in-kernel QK^T is a natural NN MXU contraction.
    kt = jnp.swapaxes(key.reshape(BH, Sk, D), -2, -1)        # (BH, D, Sk)
    v = value.reshape(BH, Sk, D)

    # Single grid step on 1-TC chips; two CORE_PARALLEL blocks on v7x.
    n_cores = _tensorcores_per_chip()
    nblk = n_cores if (n_cores > 1 and BH % n_cores == 0) else 1
    blk = BH // nblk
    dim_sem = (pltpu.CORE_PARALLEL,) if nblk > 1 else ("arbitrary",)

    kernel = functools.partial(
        _attn_kernel, scale_factor=float(scale_factor), blk=blk)

    out = pl.pallas_call(
        kernel,
        out_shape=jax.ShapeDtypeStruct((BH, Sq, D), query.dtype),
        grid_spec=pltpu.PrefetchScalarGridSpec(
            num_scalar_prefetch=0,
            grid=(nblk,),
            in_specs=[
                pl.BlockSpec((blk, Sq, D), lambda i: (i, 0, 0)),
                pl.BlockSpec((blk, D, Sk), lambda i: (i, 0, 0)),
                pl.BlockSpec((blk, Sk, D), lambda i: (i, 0, 0)),
            ],
            out_specs=pl.BlockSpec((blk, Sq, D), lambda i: (i, 0, 0)),
        ),
        compiler_params=pltpu.CompilerParams(dimension_semantics=dim_sem),
    )(q, kt, v)

    return out.reshape(B, H, Sq, D)


if __name__ == "__main__":
    rng = jax.random.PRNGKey(0)
    k1, k2, k3 = jax.random.split(rng, 3)

    # Shapes match the PyTorch module's example inputs.
    query = jax.random.normal(k1, (1, 8, 64, 64), dtype=jnp.float32)
    key = jax.random.normal(k2, (1, 8, 32, 64), dtype=jnp.float32)
    value = jax.random.normal(k3, (1, 8, 32, 64), dtype=jnp.float32)

    out = scaled_dot_product_attention(query, key, value)
    out = jax.block_until_ready(out)

    # Pure-JAX reference (highest precision so the check isn't limited by the
    # reference matmul's own precision on TPU).
    qk = jnp.einsum("bhqd,bhkd->bhqk", query, key,
                    precision=lax.Precision.HIGHEST) / SCALE_FACTOR
    ref = jnp.einsum("bhqk,bhkd->bhqd", jax.nn.softmax(qk, axis=-1), value,
                     precision=lax.Precision.HIGHEST)
    assert out.shape == (1, 8, 64, 64)
    assert jnp.allclose(out, ref, atol=2e-3, rtol=2e-3), float(
        jnp.max(jnp.abs(out - ref)))

    print("KERNEL_OK")
</pallas_src>

<mosaic_0001>
module attributes {stable_mosaic.version = 11 : i64} {
  func.func @_attn_kernel(%arg0: i32, %arg1: memref<8x64x64xf32, #tpu.memory_space<vmem>>, %arg2: memref<8x64x32xf32, #tpu.memory_space<vmem>>, %arg3: memref<8x32x64xf32, #tpu.memory_space<vmem>>, %arg4: memref<8x64x64xf32, #tpu.memory_space<vmem>>) attributes {dimension_semantics = [#tpu.dimension_semantics<arbitrary>], iteration_bounds = array<i64: 1>, scalar_prefetch = 0 : i64, scratch_operands = 0 : i64, tpu.core_type = #tpu.core_type<tc>, window_params = [{transform_indices = @transform_0, window_bounds = array<i64: 8, 64, 64>}, {transform_indices = @transform_1, window_bounds = array<i64: 8, 64, 32>}, {transform_indices = @transform_2, window_bounds = array<i64: 8, 32, 64>}, {transform_indices = @transform_3, window_bounds = array<i64: 8, 64, 64>}]} {
    %c0_i32 = arith.constant 0 : i32
    %0 = arith.index_cast %c0_i32 : i32 to index
    %c0 = arith.constant 0 : index
    %c0_0 = arith.constant 0 : index
    %1 = vector.load %arg1[%0, %c0, %c0_0] : memref<8x64x64xf32, #tpu.memory_space<vmem>>, vector<1x64x64xf32>
    %2 = vector.shape_cast %1 : vector<1x64x64xf32> to vector<64x64xf32>
    %3 = arith.index_cast %c0_i32 : i32 to index
    %c0_1 = arith.constant 0 : index
    %c0_2 = arith.constant 0 : index
    %4 = vector.load %arg2[%3, %c0_1, %c0_2] : memref<8x64x32xf32, #tpu.memory_space<vmem>>, vector<1x64x32xf32>
    %5 = vector.shape_cast %4 : vector<1x64x32xf32> to vector<64x32xf32>
    %cst = arith.constant dense<0.000000e+00> : vector<64x32xf32>
    %6 = tpu.matmul %2, %5, %cst {dimension_numbers = #tpu.dot_dimension_numbers<[1], [0], [0], [1], [0, 0, 1, 1], [], []>} : vector<64x64xf32>, vector<64x32xf32>, vector<64x32xf32> -> vector<64x32xf32>
    %cst_3 = arith.constant dense<0xFF800000> : vector<64xf32>
    %7 = vector.multi_reduction <maximumf>, %6, %cst_3 [1] : vector<64x32xf32> to vector<64xf32>
    %8 = vector.shape_cast %7 : vector<64xf32> to vector<64x1xf32>
    %9 = vector.broadcast %8 : vector<64x1xf32> to vector<64x32xf32>
    %10 = arith.subf %6, %9 : vector<64x32xf32>
    %11 = math.exp %10 : vector<64x32xf32>
    %cst_4 = arith.constant dense<0.000000e+00> : vector<64xf32>
    %12 = vector.multi_reduction <add>, %11, %cst_4 [1] : vector<64x32xf32> to vector<64xf32>
    %13 = vector.shape_cast %12 : vector<64xf32> to vector<64x1xf32>
    %14 = vector.broadcast %13 : vector<64x1xf32> to vector<64x32xf32>
    %15 = arith.divf %11, %14 : vector<64x32xf32>
    %16 = arith.index_cast %c0_i32 : i32 to index
    %c0_5 = arith.constant 0 : index
    %c0_6 = arith.constant 0 : index
    %17 = vector.load %arg3[%16, %c0_5, %c0_6] : memref<8x32x64xf32, #tpu.memory_space<vmem>>, vector<1x32x64xf32>
    %18 = vector.shape_cast %17 : vector<1x32x64xf32> to vector<32x64xf32>
    %cst_7 = arith.constant dense<0.000000e+00> : vector<64x64xf32>
    %19 = tpu.matmul %15, %18, %cst_7 {dimension_numbers = #tpu.dot_dimension_numbers<[1], [0], [0], [1], [0, 0, 1, 1], [], []>} : vector<64x32xf32>, vector<32x64xf32>, vector<64x64xf32> -> vector<64x64xf32>
    %20 = arith.index_cast %c0_i32 : i32 to index
    %c0_8 = arith.constant 0 : index
    %c0_9 = arith.constant 0 : index
    %21 = vector.load %arg4[%20, %c0_8, %c0_9] : memref<8x64x64xf32, #tpu.memory_space<vmem>>, vector<1x64x64xf32>
    %22 = vector.shape_cast %21 : vector<1x64x64xf32> to vector<64x64xf32>
    %23 = vector.shape_cast %19 : vector<64x64xf32> to vector<1x64x64xf32>
    tpu.vector_store %arg4[%20, %c0_8, %c0_9], %23 {strides = array<i32>} : memref<8x64x64xf32, #tpu.memory_space<vmem>>, vector<1x64x64xf32>,
    %c1_i32 = arith.constant 1 : i32
    %24 = arith.index_cast %c1_i32 : i32 to index
    %c0_10 = arith.constant 0 : index
    %c0_11 = arith.constant 0 : index
    %25 = vector.load %arg1[%24, %c0_10, %c0_11] : memref<8x64x64xf32, #tpu.memory_space<vmem>>, vector<1x64x64xf32>
    %26 = vector.shape_cast %25 : vector<1x64x64xf32> to vector<64x64xf32>
    %27 = arith.index_cast %c1_i32 : i32 to index
    %c0_12 = arith.constant 0 : index
    %c0_13 = arith.constant 0 : index
    %28 = vector.load %arg2[%27, %c0_12, %c0_13] : memref<8x64x32xf32, #tpu.memory_space<vmem>>, vector<1x64x32xf32>
    %29 = vector.shape_cast %28 : vector<1x64x32xf32> to vector<64x32xf32>
    %cst_14 = arith.constant dense<0.000000e+00> : vector<64x32xf32>
    %30 = tpu.matmul %26, %29, %cst_14 {dimension_numbers = #tpu.dot_dimension_numbers<[1], [0], [0], [1], [0, 0, 1, 1], [], []>} : vector<64x64xf32>, vector<64x32xf32>, vector<64x32xf32> -> vector<64x32xf32>
    %cst_15 = arith.constant dense<0xFF800000> : vector<64xf32>
    %31 = vector.multi_reduction <maximumf>, %30, %cst_15 [1] : vector<64x32xf32> to vector<64xf32>
    %32 = vector.shape_cast %31 : vector<64xf32> to vector<64x1xf32>
    %33 = vector.broadcast %32 : vector<64x1xf32> to vector<64x32xf32>
    %34 = arith.subf %30, %33 : vector<64x32xf32>
    %35 = math.exp %34 : vector<64x32xf32>
    %cst_16 = arith.constant dense<0.000000e+00> : vector<64xf32>
    %36 = vector.multi_reduction <add>, %35, %cst_16 [1] : vector<64x32xf32> to vector<64xf32>
    %37 = vector.shape_cast %36 : vector<64xf32> to vector<64x1xf32>
    %38 = vector.broadcast %37 : vector<64x1xf32> to vector<64x32xf32>
    %39 = arith.divf %35, %38 : vector<64x32xf32>
    %40 = arith.index_cast %c1_i32 : i32 to index
    %c0_17 = arith.constant 0 : index
    %c0_18 = arith.constant 0 : index
    %41 = vector.load %arg3[%40, %c0_17, %c0_18] : memref<8x32x64xf32, #tpu.memory_space<vmem>>, vector<1x32x64xf32>
    %42 = vector.shape_cast %41 : vector<1x32x64xf32> to vector<32x64xf32>
    %cst_19 = arith.constant dense<0.000000e+00> : vector<64x64xf32>
    %43 = tpu.matmul %39, %42, %cst_19 {dimension_numbers = #tpu.dot_dimension_numbers<[1], [0], [0], [1], [0, 0, 1, 1], [], []>} : vector<64x32xf32>, vector<32x64xf32>, vector<64x64xf32> -> vector<64x64xf32>
    %44 = arith.index_cast %c1_i32 : i32 to index
    %c0_20 = arith.constant 0 : index
    %c0_21 = arith.constant 0 : index
    %45 = vector.load %arg4[%44, %c0_20, %c0_21] : memref<8x64x64xf32, #tpu.memory_space<vmem>>, vector<1x64x64xf32>
    %46 = vector.shape_cast %45 : vector<1x64x64xf32> to vector<64x64xf32>
    %47 = vector.shape_cast %43 : vector<64x64xf32> to vector<1x64x64xf32>
    tpu.vector_store %arg4[%44, %c0_20, %c0_21], %47 {strides = array<i32>} : memref<8x64x64xf32, #tpu.memory_space<vmem>>, vector<1x64x64xf32>,
    %c2_i32 = arith.constant 2 : i32
    %48 = arith.index_cast %c2_i32 : i32 to index
    %c0_22 = arith.constant 0 : index
    %c0_23 = arith.constant 0 : index
    %49 = vector.load %arg1[%48, %c0_22, %c0_23] : memref<8x64x64xf32, #tpu.memory_space<vmem>>, vector<1x64x64xf32>
    %50 = vector.shape_cast %49 : vector<1x64x64xf32> to vector<64x64xf32>
    %51 = arith.index_cast %c2_i32 : i32 to index
    %c0_24 = arith.constant 0 : index
    %c0_25 = arith.constant 0 : index
    %52 = vector.load %arg2[%51, %c0_24, %c0_25] : memref<8x64x32xf32, #tpu.memory_space<vmem>>, vector<1x64x32xf32>
    %53 = vector.shape_cast %52 : vector<1x64x32xf32> to vector<64x32xf32>
    %cst_26 = arith.constant dense<0.000000e+00> : vector<64x32xf32>
    %54 = tpu.matmul %50, %53, %cst_26 {dimension_numbers = #tpu.dot_dimension_numbers<[1], [0], [0], [1], [0, 0, 1, 1], [], []>} : vector<64x64xf32>, vector<64x32xf32>, vector<64x32xf32> -> vector<64x32xf32>
    %cst_27 = arith.constant dense<0xFF800000> : vector<64xf32>
    %55 = vector.multi_reduction <maximumf>, %54, %cst_27 [1] : vector<64x32xf32> to vector<64xf32>
    %56 = vector.shape_cast %55 : vector<64xf32> to vector<64x1xf32>
    %57 = vector.broadcast %56 : vector<64x1xf32> to vector<64x32xf32>
    %58 = arith.subf %54, %57 : vector<64x32xf32>
    %59 = math.exp %58 : vector<64x32xf32>
    %cst_28 = arith.constant dense<0.000000e+00> : vector<64xf32>
    %60 = vector.multi_reduction <add>, %59, %cst_28 [1] : vector<64x32xf32> to vector<64xf32>
    %61 = vector.shape_cast %60 : vector<64xf32> to vector<64x1xf32>
    %62 = vector.broadcast %61 : vector<64x1xf32> to vector<64x32xf32>
    %63 = arith.divf %59, %62 : vector<64x32xf32>
    %64 = arith.index_cast %c2_i32 : i32 to index
    %c0_29 = arith.constant 0 : index
    %c0_30 = arith.constant 0 : index
    %65 = vector.load %arg3[%64, %c0_29, %c0_30] : memref<8x32x64xf32, #tpu.memory_space<vmem>>, vector<1x32x64xf32>
    %66 = vector.shape_cast %65 : vector<1x32x64xf32> to vector<32x64xf32>
    %cst_31 = arith.constant dense<0.000000e+00> : vector<64x64xf32>
    %67 = tpu.matmul %63, %66, %cst_31 {dimension_numbers = #tpu.dot_dimension_numbers<[1], [0], [0], [1], [0, 0, 1, 1], [], []>} : vector<64x32xf32>, vector<32x64xf32>, vector<64x64xf32> -> vector<64x64xf32>
    %68 = arith.index_cast %c2_i32 : i32 to index
    %c0_32 = arith.constant 0 : index
    %c0_33 = arith.constant 0 : index
    %69 = vector.load %arg4[%68, %c0_32, %c0_33] : memref<8x64x64xf32, #tpu.memory_space<vmem>>, vector<1x64x64xf32>
    %70 = vector.shape_cast %69 : vector<1x64x64xf32> to vector<64x64xf32>
    %71 = vector.shape_cast %67 : vector<64x64xf32> to vector<1x64x64xf32>
    tpu.vector_store %arg4[%68, %c0_32, %c0_33], %71 {strides = array<i32>} : memref<8x64x64xf32, #tpu.memory_space<vmem>>, vector<1x64x64xf32>,
    %c3_i32 = arith.constant 3 : i32
    %72 = arith.index_cast %c3_i32 : i32 to index
    %c0_34 = arith.constant 0 : index
    %c0_35 = arith.constant 0 : index
    %73 = vector.load %arg1[%72, %c0_34, %c0_35] : memref<8x64x64xf32, #tpu.memory_space<vmem>>, vector<1x64x64xf32>
    %74 = vector.shape_cast %73 : vector<1x64x64xf32> to vector<64x64xf32>
    %75 = arith.index_cast %c3_i32 : i32 to index
    %c0_36 = arith.constant 0 : index
    %c0_37 = arith.constant 0 : index
    %76 = vector.load %arg2[%75, %c0_36, %c0_37] : memref<8x64x32xf32, #tpu.memory_space<vmem>>, vector<1x64x32xf32>
    %77 = vector.shape_cast %76 : vector<1x64x32xf32> to vector<64x32xf32>
    %cst_38 = arith.constant dense<0.000000e+00> : vector<64x32xf32>
    %78 = tpu.matmul %74, %77, %cst_38 {dimension_numbers = #tpu.dot_dimension_numbers<[1], [0], [0], [1], [0, 0, 1, 1], [], []>} : vector<64x64xf32>, vector<64x32xf32>, vector<64x32xf32> -> vector<64x32xf32>
    %cst_39 = arith.constant dense<0xFF800000> : vector<64xf32>
    %79 = vector.multi_reduction <maximumf>, %78, %cst_39 [1] : vector<64x32xf32> to vector<64xf32>
    %80 = vector.shape_cast %79 : vector<64xf32> to vector<64x1xf32>
    %81 = vector.broadcast %80 : vector<64x1xf32> to vector<64x32xf32>
    %82 = arith.subf %78, %81 : vector<64x32xf32>
    %83 = math.exp %82 : vector<64x32xf32>
    %cst_40 = arith.constant dense<0.000000e+00> : vector<64xf32>
    %84 = vector.multi_reduction <add>, %83, %cst_40 [1] : vector<64x32xf32> to vector<64xf32>
    %85 = vector.shape_cast %84 : vector<64xf32> to vector<64x1xf32>
    %86 = vector.broadcast %85 : vector<64x1xf32> to vector<64x32xf32>
    %87 = arith.divf %83, %86 : vector<64x32xf32>
    %88 = arith.index_cast %c3_i32 : i32 to index
    %c0_41 = arith.constant 0 : index
    %c0_42 = arith.constant 0 : index
    %89 = vector.load %arg3[%88, %c0_41, %c0_42] : memref<8x32x64xf32, #tpu.memory_space<vmem>>, vector<1x32x64xf32>
    %90 = vector.shape_cast %89 : vector<1x32x64xf32> to vector<32x64xf32>
    %cst_43 = arith.constant dense<0.000000e+00> : vector<64x64xf32>
    %91 = tpu.matmul %87, %90, %cst_43 {dimension_numbers = #tpu.dot_dimension_numbers<[1], [0], [0], [1], [0, 0, 1, 1], [], []>} : vector<64x32xf32>, vector<32x64xf32>, vector<64x64xf32> -> vector<64x64xf32>
    %92 = arith.index_cast %c3_i32 : i32 to index
    %c0_44 = arith.constant 0 : index
    %c0_45 = arith.constant 0 : index
    %93 = vector.load %arg4[%92, %c0_44, %c0_45] : memref<8x64x64xf32, #tpu.memory_space<vmem>>, vector<1x64x64xf32>
    %94 = vector.shape_cast %93 : vector<1x64x64xf32> to vector<64x64xf32>
    %95 = vector.shape_cast %91 : vector<64x64xf32> to vector<1x64x64xf32>
    tpu.vector_store %arg4[%92, %c0_44, %c0_45], %95 {strides = array<i32>} : memref<8x64x64xf32, #tpu.memory_space<vmem>>, vector<1x64x64xf32>,
    %c4_i32 = arith.constant 4 : i32
    %96 = arith.index_cast %c4_i32 : i32 to index
    %c0_46 = arith.constant 0 : index
    %c0_47 = arith.constant 0 : index
    %97 = vector.load %arg1[%96, %c0_46, %c0_47] : memref<8x64x64xf32, #tpu.memory_space<vmem>>, vector<1x64x64xf32>
    %98 = vector.shape_cast %97 : vector<1x64x64xf32> to vector<64x64xf32>
    %99 = arith.index_cast %c4_i32 : i32 to index
    %c0_48 = arith.constant 0 : index
    %c0_49 = arith.constant 0 : index
    %100 = vector.load %arg2[%99, %c0_48, %c0_49] : memref<8x64x32xf32, #tpu.memory_space<vmem>>, vector<1x64x32xf32>
    %101 = vector.shape_cast %100 : vector<1x64x32xf32> to vector<64x32xf32>
    %cst_50 = arith.constant dense<0.000000e+00> : vector<64x32xf32>
    %102 = tpu.matmul %98, %101, %cst_50 {dimension_numbers = #tpu.dot_dimension_numbers<[1], [0], [0], [1], [0, 0, 1, 1], [], []>} : vector<64x64xf32>, vector<64x32xf32>, vector<64x32xf32> -> vector<64x32xf32>
    %cst_51 = arith.constant dense<0xFF800000> : vector<64xf32>
    %103 = vector.multi_reduction <maximumf>, %102, %cst_51 [1] : vector<64x32xf32> to vector<64xf32>
    %104 = vector.shape_cast %103 : vector<64xf32> to vector<64x1xf32>
    %105 = vector.broadcast %104 : vector<64x1xf32> to vector<64x32xf32>
    %106 = arith.subf %102, %105 : vector<64x32xf32>
    %107 = math.exp %106 : vector<64x32xf32>
    %cst_52 = arith.constant dense<0.000000e+00> : vector<64xf32>
    %108 = vector.multi_reduction <add>, %107, %cst_52 [1] : vector<64x32xf32> to vector<64xf32>
    %109 = vector.shape_cast %108 : vector<64xf32> to vector<64x1xf32>
    %110 = vector.broadcast %109 : vector<64x1xf32> to vector<64x32xf32>
    %111 = arith.divf %107, %110 : vector<64x32xf32>
    %112 = arith.index_cast %c4_i32 : i32 to index
    %c0_53 = arith.constant 0 : index
    %c0_54 = arith.constant 0 : index
    %113 = vector.load %arg3[%112, %c0_53, %c0_54] : memref<8x32x64xf32, #tpu.memory_space<vmem>>, vector<1x32x64xf32>
    %114 = vector.shape_cast %113 : vector<1x32x64xf32> to vector<32x64xf32>
    %cst_55 = arith.constant dense<0.000000e+00> : vector<64x64xf32>
    %115 = tpu.matmul %111, %114, %cst_55 {dimension_numbers = #tpu.dot_dimension_numbers<[1], [0], [0], [1], [0, 0, 1, 1], [], []>} : vector<64x32xf32>, vector<32x64xf32>, vector<64x64xf32> -> vector<64x64xf32>
    %116 = arith.index_cast %c4_i32 : i32 to index
    %c0_56 = arith.constant 0 : index
    %c0_57 = arith.constant 0 : index
    %117 = vector.load %arg4[%116, %c0_56, %c0_57] : memref<8x64x64xf32, #tpu.memory_space<vmem>>, vector<1x64x64xf32>
    %118 = vector.shape_cast %117 : vector<1x64x64xf32> to vector<64x64xf32>
    %119 = vector.shape_cast %115 : vector<64x64xf32> to vector<1x64x64xf32>
    tpu.vector_store %arg4[%116, %c0_56, %c0_57], %119 {strides = array<i32>} : memref<8x64x64xf32, #tpu.memory_space<vmem>>, vector<1x64x64xf32>,
    %c5_i32 = arith.constant 5 : i32
    %120 = arith.index_cast %c5_i32 : i32 to index
    %c0_58 = arith.constant 0 : index
    %c0_59 = arith.constant 0 : index
    %121 = vector.load %arg1[%120, %c0_58, %c0_59] : memref<8x64x64xf32, #tpu.memory_space<vmem>>, vector<1x64x64xf32>
    %122 = vector.shape_cast %121 : vector<1x64x64xf32> to vector<64x64xf32>
    %123 = arith.index_cast %c5_i32 : i32 to index
    %c0_60 = arith.constant 0 : index
    %c0_61 = arith.constant 0 : index
    %124 = vector.load %arg2[%123, %c0_60, %c0_61] : memref<8x64x32xf32, #tpu.memory_space<vmem>>, vector<1x64x32xf32>
    %125 = vector.shape_cast %124 : vector<1x64x32xf32> to vector<64x32xf32>
    %cst_62 = arith.constant dense<0.000000e+00> : vector<64x32xf32>
    %126 = tpu.matmul %122, %125, %cst_62 {dimension_numbers = #tpu.dot_dimension_numbers<[1], [0], [0], [1], [0, 0, 1, 1], [], []>} : vector<64x64xf32>, vector<64x32xf32>, vector<64x32xf32> -> vector<64x32xf32>
    %cst_63 = arith.constant dense<0xFF800000> : vector<64xf32>
    %127 = vector.multi_reduction <maximumf>, %126, %cst_63 [1] : vector<64x32xf32> to vector<64xf32>
    %128 = vector.shape_cast %127 : vector<64xf32> to vector<64x1xf32>
    %129 = vector.broadcast %128 : vector<64x1xf32> to vector<64x32xf32>
    %130 = arith.subf %126, %129 : vector<64x32xf32>
    %131 = math.exp %130 : vector<64x32xf32>
    %cst_64 = arith.constant dense<0.000000e+00> : vector<64xf32>
    %132 = vector.multi_reduction <add>, %131, %cst_64 [1] : vector<64x32xf32> to vector<64xf32>
    %133 = vector.shape_cast %132 : vector<64xf32> to vector<64x1xf32>
    %134 = vector.broadcast %133 : vector<64x1xf32> to vector<64x32xf32>
    %135 = arith.divf %131, %134 : vector<64x32xf32>
    %136 = arith.index_cast %c5_i32 : i32 to index
    %c0_65 = arith.constant 0 : index
    %c0_66 = arith.constant 0 : index
    %137 = vector.load %arg3[%136, %c0_65, %c0_66] : memref<8x32x64xf32, #tpu.memory_space<vmem>>, vector<1x32x64xf32>
    %138 = vector.shape_cast %137 : vector<1x32x64xf32> to vector<32x64xf32>
    %cst_67 = arith.constant dense<0.000000e+00> : vector<64x64xf32>
    %139 = tpu.matmul %135, %138, %cst_67 {dimension_numbers = #tpu.dot_dimension_numbers<[1], [0], [0], [1], [0, 0, 1, 1], [], []>} : vector<64x32xf32>, vector<32x64xf32>, vector<64x64xf32> -> vector<64x64xf32>
    %140 = arith.index_cast %c5_i32 : i32 to index
    %c0_68 = arith.constant 0 : index
    %c0_69 = arith.constant 0 : index
    %141 = vector.load %arg4[%140, %c0_68, %c0_69] : memref<8x64x64xf32, #tpu.memory_space<vmem>>, vector<1x64x64xf32>
    %142 = vector.shape_cast %141 : vector<1x64x64xf32> to vector<64x64xf32>
    %143 = vector.shape_cast %139 : vector<64x64xf32> to vector<1x64x64xf32>
    tpu.vector_store %arg4[%140, %c0_68, %c0_69], %143 {strides = array<i32>} : memref<8x64x64xf32, #tpu.memory_space<vmem>>, vector<1x64x64xf32>,
    %c6_i32 = arith.constant 6 : i32
    %144 = arith.index_cast %c6_i32 : i32 to index
    %c0_70 = arith.constant 0 : index
    %c0_71 = arith.constant 0 : index
    %145 = vector.load %arg1[%144, %c0_70, %c0_71] : memref<8x64x64xf32, #tpu.memory_space<vmem>>, vector<1x64x64xf32>
    %146 = vector.shape_cast %145 : vector<1x64x64xf32> to vector<64x64xf32>
    %147 = arith.index_cast %c6_i32 : i32 to index
    %c0_72 = arith.constant 0 : index
    %c0_73 = arith.constant 0 : index
    %148 = vector.load %arg2[%147, %c0_72, %c0_73] : memref<8x64x32xf32, #tpu.memory_space<vmem>>, vector<1x64x32xf32>
    %149 = vector.shape_cast %148 : vector<1x64x32xf32> to vector<64x32xf32>
    %cst_74 = arith.constant dense<0.000000e+00> : vector<64x32xf32>
    %150 = tpu.matmul %146, %149, %cst_74 {dimension_numbers = #tpu.dot_dimension_numbers<[1], [0], [0], [1], [0, 0, 1, 1], [], []>} : vector<64x64xf32>, vector<64x32xf32>, vector<64x32xf32> -> vector<64x32xf32>
    %cst_75 = arith.constant dense<0xFF800000> : vector<64xf32>
    %151 = vector.multi_reduction <maximumf>, %150, %cst_75 [1] : vector<64x32xf32> to vector<64xf32>
    %152 = vector.shape_cast %151 : vector<64xf32> to vector<64x1xf32>
    %153 = vector.broadcast %152 : vector<64x1xf32> to vector<64x32xf32>
    %154 = arith.subf %150, %153 : vector<64x32xf32>
    %155 = math.exp %154 : vector<64x32xf32>
    %cst_76 = arith.constant dense<0.000000e+00> : vector<64xf32>
    %156 = vector.multi_reduction <add>, %155, %cst_76 [1] : vector<64x32xf32> to vector<64xf32>
    %157 = vector.shape_cast %156 : vector<64xf32> to vector<64x1xf32>
    %158 = vector.broadcast %157 : vector<64x1xf32> to vector<64x32xf32>
    %159 = arith.divf %155, %158 : vector<64x32xf32>
    %160 = arith.index_cast %c6_i32 : i32 to index
    %c0_77 = arith.constant 0 : index
    %c0_78 = arith.constant 0 : index
    %161 = vector.load %arg3[%160, %c0_77, %c0_78] : memref<8x32x64xf32, #tpu.memory_space<vmem>>, vector<1x32x64xf32>
    %162 = vector.shape_cast %161 : vector<1x32x64xf32> to vector<32x64xf32>
    %cst_79 = arith.constant dense<0.000000e+00> : vector<64x64xf32>
    %163 = tpu.matmul %159, %162, %cst_79 {dimension_numbers = #tpu.dot_dimension_numbers<[1], [0], [0], [1], [0, 0, 1, 1], [], []>} : vector<64x32xf32>, vector<32x64xf32>, vector<64x64xf32> -> vector<64x64xf32>
    %164 = arith.index_cast %c6_i32 : i32 to index
    %c0_80 = arith.constant 0 : index
    %c0_81 = arith.constant 0 : index
    %165 = vector.load %arg4[%164, %c0_80, %c0_81] : memref<8x64x64xf32, #tpu.memory_space<vmem>>, vector<1x64x64xf32>
    %166 = vector.shape_cast %165 : vector<1x64x64xf32> to vector<64x64xf32>
    %167 = vector.shape_cast %163 : vector<64x64xf32> to vector<1x64x64xf32>
    tpu.vector_store %arg4[%164, %c0_80, %c0_81], %167 {strides = array<i32>} : memref<8x64x64xf32, #tpu.memory_space<vmem>>, vector<1x64x64xf32>,
    %c7_i32 = arith.constant 7 : i32
    %168 = arith.index_cast %c7_i32 : i32 to index
    %c0_82 = arith.constant 0 : index
    %c0_83 = arith.constant 0 : index
    %169 = vector.load %arg1[%168, %c0_82, %c0_83] : memref<8x64x64xf32, #tpu.memory_space<vmem>>, vector<1x64x64xf32>
    %170 = vector.shape_cast %169 : vector<1x64x64xf32> to vector<64x64xf32>
    %171 = arith.index_cast %c7_i32 : i32 to index
    %c0_84 = arith.constant 0 : index
    %c0_85 = arith.constant 0 : index
    %172 = vector.load %arg2[%171, %c0_84, %c0_85] : memref<8x64x32xf32, #tpu.memory_space<vmem>>, vector<1x64x32xf32>
    %173 = vector.shape_cast %172 : vector<1x64x32xf32> to vector<64x32xf32>
    %cst_86 = arith.constant dense<0.000000e+00> : vector<64x32xf32>
    %174 = tpu.matmul %170, %173, %cst_86 {dimension_numbers = #tpu.dot_dimension_numbers<[1], [0], [0], [1], [0, 0, 1, 1], [], []>} : vector<64x64xf32>, vector<64x32xf32>, vector<64x32xf32> -> vector<64x32xf32>
    %cst_87 = arith.constant dense<0xFF800000> : vector<64xf32>
    %175 = vector.multi_reduction <maximumf>, %174, %cst_87 [1] : vector<64x32xf32> to vector<64xf32>
    %176 = vector.shape_cast %175 : vector<64xf32> to vector<64x1xf32>
    %177 = vector.broadcast %176 : vector<64x1xf32> to vector<64x32xf32>
    %178 = arith.subf %174, %177 : vector<64x32xf32>
    %179 = math.exp %178 : vector<64x32xf32>
    %cst_88 = arith.constant dense<0.000000e+00> : vector<64xf32>
    %180 = vector.multi_reduction <add>, %179, %cst_88 [1] : vector<64x32xf32> to vector<64xf32>
    %181 = vector.shape_cast %180 : vector<64xf32> to vector<64x1xf32>
    %182 = vector.broadcast %181 : vector<64x1xf32> to vector<64x32xf32>
    %183 = arith.divf %179, %182 : vector<64x32xf32>
    %184 = arith.index_cast %c7_i32 : i32 to index
    %c0_89 = arith.constant 0 : index
    %c0_90 = arith.constant 0 : index
    %185 = vector.load %arg3[%184, %c0_89, %c0_90] : memref<8x32x64xf32, #tpu.memory_space<vmem>>, vector<1x32x64xf32>
    %186 = vector.shape_cast %185 : vector<1x32x64xf32> to vector<32x64xf32>
    %cst_91 = arith.constant dense<0.000000e+00> : vector<64x64xf32>
    %187 = tpu.matmul %183, %186, %cst_91 {dimension_numbers = #tpu.dot_dimension_numbers<[1], [0], [0], [1], [0, 0, 1, 1], [], []>} : vector<64x32xf32>, vector<32x64xf32>, vector<64x64xf32> -> vector<64x64xf32>
    %188 = arith.index_cast %c7_i32 : i32 to index
    %c0_92 = arith.constant 0 : index
    %c0_93 = arith.constant 0 : index
    %189 = vector.load %arg4[%188, %c0_92, %c0_93] : memref<8x64x64xf32, #tpu.memory_space<vmem>>, vector<1x64x64xf32>
    %190 = vector.shape_cast %189 : vector<1x64x64xf32> to vector<64x64xf32>
    %191 = vector.shape_cast %187 : vector<64x64xf32> to vector<1x64x64xf32>
    tpu.vector_store %arg4[%188, %c0_92, %c0_93], %191 {strides = array<i32>} : memref<8x64x64xf32, #tpu.memory_space<vmem>>, vector<1x64x64xf32>,
    %c8_i32 = arith.constant 8 : i32
    return
  }
  func.func @transform_0(%arg0: i32) -> (i32, i32, i32) {
    %c0_i32 = arith.constant 0 : i32
    %c0_i32_0 = arith.constant 0 : i32
    %c0_i32_1 = arith.constant 0 : i32
    return %arg0, %c0_i32, %c0_i32_0 : i32, i32, i32
  }
  func.func @transform_1(%arg0: i32) -> (i32, i32, i32) {
    %c0_i32 = arith.constant 0 : i32
    %c0_i32_0 = arith.constant 0 : i32
    %c0_i32_1 = arith.constant 0 : i32
    return %arg0, %c0_i32, %c0_i32_0 : i32, i32, i32
  }
  func.func @transform_2(%arg0: i32) -> (i32, i32, i32) {
    %c0_i32 = arith.constant 0 : i32
    %c0_i32_0 = arith.constant 0 : i32
    %c0_i32_1 = arith.constant 0 : i32
    return %arg0, %c0_i32, %c0_i32_0 : i32, i32, i32
  }
  func.func @transform_3(%arg0: i32) -> (i32, i32, i32) {
    %c0_i32 = arith.constant 0 : i32
    %c0_i32_0 = arith.constant 0 : i32
    %c0_i32_1 = arith.constant 0 : i32
    return %arg0, %c0_i32, %c0_i32_0 : i32, i32, i32
  }
}

</mosaic_0001>

<llo_original>
// kernel: tpu_custom_call.1
$region0: #{tpu_custom_call.1}
  #allocation0 [shape = 'u32[]', space=smem, size = 0x4, offset = 0x4, fixed_abs, tag = 'smem constant byte address 0x4 - core index']
  #allocation1 [shape = 'u32[72,128]{1,0:T(1,128)}', space=vmem, size = 0x9000, scoped, tag = 'internal scratch']
  %s0 = inlined_call_operand.vmem [shape: f32[8,64,64], index: 0, kind: input, shape index: {}]
  %s1 = inlined_call_operand.vmem [shape: f32[8,64,32], index: 1, kind: input, shape index: {}]
  %s2 = inlined_call_operand.vmem [shape: f32[8,32,64], index: 2, kind: input, shape index: {}]
  %s3 = inlined_call_operand.hbm [shape: f32[8,64,64], index: 3, kind: output, shape index: {}]
  %s4 = sld [smem:[#allocation0]]
  $region22: #{tpu_custom_call.1} parent=0
    _
  %s6 = ssub.s32 1, %s4
  %s7 = scalar_select 0, %s6, %s4
  $region1: #{tpu_custom_call.1} parent=0
    #allocation2 [shape = 'u8[262144]{0}', space=vmem, size = 0x40000, scoped, tag = 'output window, operand 0, single buffered']
    #allocation3 [shape = 's32[1]{0}', space=sflag, size = 0x4, scoped, tag = 'scoped memory for tpu_custom_call.1']
    %8 = vsyncpa [#allocation3], 0
    // Predicated region
    $region2: #{tpu_custom_call.1} parent=1 // pred_check
      _
    $region3: #{tpu_custom_call.1} parent=1 // pred_check_branch
      %10 = sbr.rel (0) target = $region5
    $region4: #{tpu_custom_call.1} parent=1 // pred_region
      _
    $region5: #{tpu_custom_call.1} parent=1 // pred_fallthru
      _
    // Predicated region
    $region6: #{tpu_custom_call.1} parent=1 // pred_check
      _
    $region7: #{tpu_custom_call.1} parent=1 // pred_check_branch
      %12 = sbr.rel (0) target = $region9
    $region8: #{tpu_custom_call.1} parent=1 // pred_region
      _
    $region9: #{tpu_custom_call.1} parent=1 // pred_fallthru
      _
    // Predicated region
    $region10: #{tpu_custom_call.1} parent=1 // pred_check
      _
    $region11: #{tpu_custom_call.1} parent=1 // pred_check_branch
      %14 = sbr.rel (0) target = $region13
    $region12: #{tpu_custom_call.1} parent=1 // pred_region
      _
    $region13: #{tpu_custom_call.1} parent=1 // pred_fallthru
      _
    %v15 = vld [vmem:[%s0] sm:$0xff]
    %v16 = vld [vmem:[%s0 + $0x8] sm:$0xff]
    %v17 = vld [vmem:[%s0 + $0x10] sm:$0xff]
    %v18 = vld [vmem:[%s0 + $0x18] sm:$0xff]
    %v19 = vld [vmem:[%s0 + $0x20] sm:$0xff]
    %v20 = vld [vmem:[%s0 + $0x28] sm:$0xff]
    %v21 = vld [vmem:[%s0 + $0x30] sm:$0xff]
    %v22 = vld [vmem:[%s0 + $0x38] sm:$0xff]
    %v23 = vld [vmem:[%s1] sm:$0xff]
    %v24 = vld [vmem:[%s1 + $0x8] sm:$0xff]
    %v25 = vld [vmem:[%s1 + $0x10] sm:$0xff]
    %v26 = vld [vmem:[%s1 + $0x18] sm:$0xff]
    %v27 = vld [vmem:[%s1 + $0x20] sm:$0xff]
    %v28 = vld [vmem:[%s1 + $0x28] sm:$0xff]
    %v29 = vld [vmem:[%s1 + $0x30] sm:$0xff]
    %v30 = vld [vmem:[%s1 + $0x38] sm:$0xff]
    %vm31 = vcmask 523264
    %v33 = vsel %vm31, %v15, 0
    %v36 = vsel %vm31, %v16, 0
    %v39 = vsel %vm31, %v17, 0
    %v42 = vsel %vm31, %v18, 0
    %v45 = vsel %vm31, %v19, 0
    %v48 = vsel %vm31, %v20, 0
    %v51 = vsel %vm31, %v21, 0
    %v54 = vsel %vm31, %v22, 0
    %56 = vmatpush.msra.mxu0 0.0
    %57 = vmatpush.msra.mxu0 0.0
    %58 = vmatpush.msra.mxu0 0.0
    %59 = vmatpush.msra.mxu0 0.0
    %60 = vmatpush.msra.mxu0 0.0
    %61 = vmatpush.msra.mxu0 0.0
    %62 = vmatpush.msra.mxu0 0.0
    %63 = vmatpush.msra.mxu0 0.0
    %64 = vmatpush.msra.mxu0 %v30
    %65 = vmatpush.msra.mxu0 %v29
    %66 = vmatpush.msra.mxu0 %v28
    %67 = vmatpush.msra.mxu0 %v27
    %68 = vmatpush.msra.mxu0 %v26
    %69 = vmatpush.msra.mxu0 %v25
    %70 = vmatpush.msra.mxu0 %v24
    %71 = vmatpush.msra.mxu0 %v23
    %72 = vmatmul.f32.gmra.mxu0 %v33
    %v73 = vpop.f32.mrf.mxu0
    %v74 = vadd.f32 0.0, %v73
    %75 = vmatmul.f32.gmra.mxu0 %v36
    %v76 = vpop.f32.mrf.mxu0
    %v77 = vadd.f32 0.0, %v76
    %78 = vmatmul.f32.gmra.mxu0 %v39
    %v79 = vpop.f32.mrf.mxu0
    %v80 = vadd.f32 0.0, %v79
    %81 = vmatmul.f32.gmra.mxu0 %v42
    %v82 = vpop.f32.mrf.mxu0
    %v83 = vadd.f32 0.0, %v82
    %84 = vmatmul.f32.gmra.mxu0 %v45
    %v85 = vpop.f32.mrf.mxu0
    %v86 = vadd.f32 0.0, %v85
    %87 = vmatmul.f32.gmra.mxu0 %v48
    %v88 = vpop.f32.mrf.mxu0
    %v89 = vadd.f32 0.0, %v88
    %90 = vmatmul.f32.gmra.mxu0 %v51
    %v91 = vpop.f32.mrf.mxu0
    %v92 = vadd.f32 0.0, %v91
    %93 = vmatmul.f32.gmra.mxu0 %v54
    %v94 = vpop.f32.mrf.mxu0
    %v95 = vadd.f32 0.0, %v94
    %96 = vdwg.mxu0
    %vm97 = vcmask 261120
    %v98 = vsel %vm97, %v74, -inf
    %99 = vmax.xlane.f32.xlu0 %v98
    %v100 = vpop.xlane.xlu0 %99
    %v101 = vsel %vm97, %v77, -inf
    %102 = vmax.xlane.f32.xlu0 %v101
    %v103 = vpop.xlane.xlu0 %102
    %v104 = vsel %vm97, %v80, -inf
    %105 = vmax.xlane.f32.xlu0 %v104
    %v106 = vpop.xlane.xlu0 %105
    %v107 = vsel %vm97, %v83, -inf
    %108 = vmax.xlane.f32.xlu0 %v107
    %v109 = vpop.xlane.xlu0 %108
    %v110 = vsel %vm97, %v86, -inf
    %111 = vmax.xlane.f32.xlu0 %v110
    %v112 = vpop.xlane.xlu0 %111
    %v113 = vsel %vm97, %v89, -inf
    %114 = vmax.xlane.f32.xlu0 %v113
    %v115 = vpop.xlane.xlu0 %114
    %v116 = vsel %vm97, %v92, -inf
    %117 = vmax.xlane.f32.xlu0 %v116
    %v118 = vpop.xlane.xlu0 %117
    %v119 = vsel %vm97, %v95, -inf
    %120 = vmax.xlane.f32.xlu0 %v119
    %v121 = vpop.xlane.xlu0 %120
    %v122 = vsub.f32 %v74, %v100
    %v123 = vsub.f32 %v77, %v103
    %v124 = vsub.f32 %v80, %v106
    %v125 = vsub.f32 %v83, %v109
    %v126 = vsub.f32 %v86, %v112
    %v127 = vsub.f32 %v89, %v115
    %v128 = vsub.f32 %v92, %v118
    %v129 = vsub.f32 %v95, %v121
    %v130 = vmul.f32 %v122, 1.442695
    %v131 = vpow.pop %v130
    %v132 = vmul.f32 %v123, 1.442695
    %v133 = vpow.pop %v132
    %v134 = vmul.f32 %v124, 1.442695
    %v135 = vpow.pop %v134
    %v136 = vmul.f32 %v125, 1.442695
    %v137 = vpow.pop %v136
    %v138 = vmul.f32 %v126, 1.442695
    %v139 = vpow.pop %v138
    %v140 = vmul.f32 %v127, 1.442695
    %v141 = vpow.pop %v140
    %v142 = vmul.f32 %v128, 1.442695
    %v143 = vpow.pop %v142
    %v144 = vmul.f32 %v129, 1.442695
    %v145 = vpow.pop %v144
    %v146 = vsel %vm97, %v131, 0.0
    %147 = vadd.xlane.f32.xlu0 %v146
    %v148 = vpop.xlane.xlu0 %147
    %v149 = vsel %vm97, %v133, 0.0
    %150 = vadd.xlane.f32.xlu0 %v149
    %v151 = vpop.xlane.xlu0 %150
    %v152 = vsel %vm97, %v135, 0.0
    %153 = vadd.xlane.f32.xlu0 %v152
    %v154 = vpop.xlane.xlu0 %153
    %v155 = vsel %vm97, %v137, 0.0
    %156 = vadd.xlane.f32.xlu0 %v155
    %v157 = vpop.xlane.xlu0 %156
    %v158 = vsel %vm97, %v139, 0.0
    %159 = vadd.xlane.f32.xlu0 %v158
    %v160 = vpop.xlane.xlu0 %159
    %v161 = vsel %vm97, %v141, 0.0
    %162 = vadd.xlane.f32.xlu0 %v161
    %v163 = vpop.xlane.xlu0 %162
    %v164 = vsel %vm97, %v143, 0.0
    %165 = vadd.xlane.f32.xlu0 %v164
    %v166 = vpop.xlane.xlu0 %165
    %v167 = vsel %vm97, %v145, 0.0
    %168 = vadd.xlane.f32.xlu0 %v167
    %v169 = vpop.xlane.xlu0 %168
    %v170 = vrcp.pop %v148
    %v171 = vmul.f32 %v148, %v170
    %v172 = vsub.f32 1.0, %v171
    %v173 = vmul.f32 %v170, %v172
    %v174 = vadd.f32 %v170, %v173
    %vm175 = vweird.f32 %v148
    %vm176 = vweird.f32 %v170
    %vm177 = vmor %vm175, %vm176
    %v178 = vsel %vm177, %v170, %v174
    %v179 = vand.u32 2147483647, %v148
    %vm180 = vcmp.eq.f32.partialorder %v179, 8.507059e+37
    %v181 = vand.u32 %v148, 2147483648
    %v182 = vor.u32 1.1754944e-38, %v181
    %v183 = vsel %vm180, %v182, %v178
    %v184 = vmul.f32 %v131, %v183
    %v185 = vrcp.pop %v151
    %v186 = vmul.f32 %v151, %v185
    %v187 = vsub.f32 1.0, %v186
    %v188 = vmul.f32 %v185, %v187
    %v189 = vadd.f32 %v185, %v188
    %vm190 = vweird.f32 %v151
    %vm191 = vweird.f32 %v185
    %vm192 = vmor %vm190, %vm191
    %v193 = vsel %vm192, %v185, %v189
    %v194 = vand.u32 2147483647, %v151
    %vm195 = vcmp.eq.f32.partialorder %v194, 8.507059e+37
    %v196 = vand.u32 %v151, 2147483648
    %v197 = vor.u32 1.1754944e-38, %v196
    %v198 = vsel %vm195, %v197, %v193
    %v199 = vmul.f32 %v133, %v198
    %v200 = vrcp.pop %v154
    %v201 = vmul.f32 %v154, %v200
    %v202 = vsub.f32 1.0, %v201
    %v203 = vmul.f32 %v200, %v202
    %v204 = vadd.f32 %v200, %v203
    %vm205 = vweird.f32 %v154
    %vm206 = vweird.f32 %v200
    %vm207 = vmor %vm205, %vm206
    %v208 = vsel %vm207, %v200, %v204
    %v209 = vand.u32 2147483647, %v154
    %vm210 = vcmp.eq.f32.partialorder %v209, 8.507059e+37
    %v211 = vand.u32 %v154, 2147483648
    %v212 = vor.u32 1.1754944e-38, %v211
    %v213 = vsel %vm210, %v212, %v208
    %v214 = vmul.f32 %v135, %v213
    %v215 = vrcp.pop %v157
    %v216 = vmul.f32 %v157, %v215
    %v217 = vsub.f32 1.0, %v216
    %v218 = vmul.f32 %v215, %v217
    %v219 = vadd.f32 %v215, %v218
    %vm220 = vweird.f32 %v157
    %vm221 = vweird.f32 %v215
    %vm222 = vmor %vm220, %vm221
    %v223 = vsel %vm222, %v215, %v219
    %v224 = vand.u32 2147483647, %v157
    %vm225 = vcmp.eq.f32.partialorder %v224, 8.507059e+37
    %v226 = vand.u32 %v157, 2147483648
    %v227 = vor.u32 1.1754944e-38, %v226
    %v228 = vsel %vm225, %v227, %v223
    %v229 = vmul.f32 %v137, %v228
    %v230 = vrcp.pop %v160
    %v231 = vmul.f32 %v160, %v230
    %v232 = vsub.f32 1.0, %v231
    %v233 = vmul.f32 %v230, %v232
    %v234 = vadd.f32 %v230, %v233
    %vm235 = vweird.f32 %v160
    %vm236 = vweird.f32 %v230
    %vm237 = vmor %vm235, %vm236
    %v238 = vsel %vm237, %v230, %v234
    %v239 = vand.u32 2147483647, %v160
    %vm240 = vcmp.eq.f32.partialorder %v239, 8.507059e+37
    %v241 = vand.u32 %v160, 2147483648
    %v242 = vor.u32 1.1754944e-38, %v241
    %v243 = vsel %vm240, %v242, %v238
    %v244 = vmul.f32 %v139, %v243
    %v245 = vrcp.pop %v163
    %v246 = vmul.f32 %v163, %v245
    %v247 = vsub.f32 1.0, %v246
    %v248 = vmul.f32 %v245, %v247
    %v249 = vadd.f32 %v245, %v248
    %vm250 = vweird.f32 %v163
    %vm251 = vweird.f32 %v245
    %vm252 = vmor %vm250, %vm251
    %v253 = vsel %vm252, %v245, %v249
    %v254 = vand.u32 2147483647, %v163
    %vm255 = vcmp.eq.f32.partialorder %v254, 8.507059e+37
    %v256 = vand.u32 %v163, 2147483648
    %v257 = vor.u32 1.1754944e-38, %v256
    %v258 = vsel %vm255, %v257, %v253
    %v259 = vmul.f32 %v141, %v258
    %v260 = vrcp.pop %v166
    %v261 = vmul.f32 %v166, %v260
    %v262 = vsub.f32 1.0, %v261
    %v263 = vmul.f32 %v260, %v262
    %v264 = vadd.f32 %v260, %v263
    %vm265 = vweird.f32 %v166
    %vm266 = vweird.f32 %v260
    %vm267 = vmor %vm265, %vm266
    %v268 = vsel %vm267, %v260, %v264
    %v269 = vand.u32 2147483647, %v166
    %vm270 = vcmp.eq.f32.partialorder %v269, 8.507059e+37
    %v271 = vand.u32 %v166, 2147483648
    %v272 = vor.u32 1.1754944e-38, %v271
    %v273 = vsel %vm270, %v272, %v268
    %v274 = vmul.f32 %v143, %v273
    %v275 = vrcp.pop %v169
    %v276 = vmul.f32 %v169, %v275
    %v277 = vsub.f32 1.0, %v276
    %v278 = vmul.f32 %v275, %v277
    %v279 = vadd.f32 %v275, %v278
    %vm280 = vweird.f32 %v169
    %vm281 = vweird.f32 %v275
    %vm282 = vmor %vm280, %vm281
    %v283 = vsel %vm282, %v275, %v279
    %v284 = vand.u32 2147483647, %v169
    %vm285 = vcmp.eq.f32.partialorder %v284, 8.507059e+37
    %v286 = vand.u32 %v169, 2147483648
    %v287 = vor.u32 1.1754944e-38, %v286
    %v288 = vsel %vm285, %v287, %v283
    %v289 = vmul.f32 %v145, %v288
    %v290 = vld [vmem:[%s2] sm:$0xff]
    %v291 = vld [vmem:[%s2 + $0x8] sm:$0xff]
    %v292 = vld [vmem:[%s2 + $0x10] sm:$0xff]
    %v293 = vld [vmem:[%s2 + $0x18] sm:$0xff]
    %v295 = vsel %vm97, %v184, 0
    %v298 = vsel %vm97, %v199, 0
    %v301 = vsel %vm97, %v214, 0
    %v304 = vsel %vm97, %v229, 0
    %v307 = vsel %vm97, %v244, 0
    %v310 = vsel %vm97, %v259, 0
    %v313 = vsel %vm97, %v274, 0
    %v316 = vsel %vm97, %v289, 0
    %318 = vmatpush.msra.mxu0 0.0
    %319 = vmatpush.msra.mxu0 0.0
    %320 = vmatpush.msra.mxu0 0.0
    %321 = vmatpush.msra.mxu0 0.0
    %322 = vmatpush.msra.mxu0 0.0
    %323 = vmatpush.msra.mxu0 0.0
    %324 = vmatpush.msra.mxu0 0.0
    %325 = vmatpush.msra.mxu0 0.0
    %326 = vmatpush.msra.mxu0 0.0
    %327 = vmatpush.msra.mxu0 0.0
    %328 = vmatpush.msra.mxu0 0.0
    %329 = vmatpush.msra.mxu0 0.0
    %330 = vmatpush.msra.mxu0 %v293
    %331 = vmatpush.msra.mxu0 %v292
    %332 = vmatpush.msra.mxu0 %v291
    %333 = vmatpush.msra.mxu0 %v290
    %334 = vmatmul.f32.gmra.mxu0 %v295
    %v335 = vpop.f32.mrf.mxu0
    %v336 = vadd.f32 0.0, %v335
    %337 = vmatmul.f32.gmra.mxu0 %v298
    %v338 = vpop.f32.mrf.mxu0
    %v339 = vadd.f32 0.0, %v338
    %340 = vmatmul.f32.gmra.mxu0 %v301
    %v341 = vpop.f32.mrf.mxu0
    %v342 = vadd.f32 0.0, %v341
    %343 = vmatmul.f32.gmra.mxu0 %v304
    %v344 = vpop.f32.mrf.mxu0
    %v345 = vadd.f32 0.0, %v344
    %346 = vmatmul.f32.gmra.mxu0 %v307
    %v347 = vpop.f32.mrf.mxu0
    %v348 = vadd.f32 0.0, %v347
    %349 = vmatmul.f32.gmra.mxu0 %v310
    %v350 = vpop.f32.mrf.mxu0
    %v351 = vadd.f32 0.0, %v350
    %352 = vmatmul.f32.gmra.mxu0 %v313
    %v353 = vpop.f32.mrf.mxu0
    %v354 = vadd.f32 0.0, %v353
    %355 = vmatmul.f32.gmra.mxu0 %v316
    %v356 = vpop.f32.mrf.mxu0
    %v357 = vadd.f32 0.0, %v356
    %358 = vdwg.mxu0
    %359 = vst.msk [vmem:[#allocation2] sm:$0xff] %vm31, %v336
    %360 = vst.msk [vmem:[#allocation2 + $0x8] sm:$0xff] %vm31, %v339
    %361 = vst.msk [vmem:[#allocation2 + $0x10] sm:$0xff] %vm31, %v342
    %362 = vst.msk [vmem:[#allocation2 + $0x18] sm:$0xff] %vm31, %v345
    %363 = vst.msk [vmem:[#allocation2 + $0x20] sm:$0xff] %vm31, %v348
    %364 = vst.msk [vmem:[#allocation2 + $0x28] sm:$0xff] %vm31, %v351
    %365 = vst.msk [vmem:[#allocation2 + $0x30] sm:$0xff] %vm31, %v354
    %366 = vst.msk [vmem:[#allocation2 + $0x38] sm:$0xff] %vm31, %v357
    %s367 = scalar_lea.vmem %s0, 64
    %v368 = vld [vmem:[%s367] sm:$0xff]
    %v369 = vld [vmem:[%s367 + $0x8] sm:$0xff]
    %v370 = vld [vmem:[%s367 + $0x10] sm:$0xff]
    %v371 = vld [vmem:[%s367 + $0x18] sm:$0xff]
    %v372 = vld [vmem:[%s367 + $0x20] sm:$0xff]
    %v373 = vld [vmem:[%s367 + $0x28] sm:$0xff]
    %v374 = vld [vmem:[%s367 + $0x30] sm:$0xff]
    %v375 = vld [vmem:[%s367 + $0x38] sm:$0xff]
    %s376 = scalar_lea.vmem %s1, 64
    %v377 = vld [vmem:[%s376] sm:$0xff]
    %v378 = vld [vmem:[%s376 + $0x8] sm:$0xff]
    %v379 = vld [vmem:[%s376 + $0x10] sm:$0xff]
    %v380 = vld [vmem:[%s376 + $0x18] sm:$0xff]
    %v381 = vld [vmem:[%s376 + $0x20] sm:$0xff]
    %v382 = vld [vmem:[%s376 + $0x28] sm:$0xff]
    %v383 = vld [vmem:[%s376 + $0x30] sm:$0xff]
    %v384 = vld [vmem:[%s376 + $0x38] sm:$0xff]
    %v386 = vsel %vm31, %v368, 0
    %v389 = vsel %vm31, %v369, 0
    %v392 = vsel %vm31, %v370, 0
    %v395 = vsel %vm31, %v371, 0
    %v398 = vsel %vm31, %v372, 0
    %v401 = vsel %vm31, %v373, 0
    %v404 = vsel %vm31, %v374, 0
    %v407 = vsel %vm31, %v375, 0
    %409 = vmatpush.msra.mxu0 0.0
    %410 = vmatpush.msra.mxu0 0.0
    %411 = vmatpush.msra.mxu0 0.0
    %412 = vmatpush.msra.mxu0 0.0
    %413 = vmatpush.msra.mxu0 0.0
    %414 = vmatpush.msra.mxu0 0.0
    %415 = vmatpush.msra.mxu0 0.0
    %416 = vmatpush.msra.mxu0 0.0
    %417 = vmatpush.msra.mxu0 %v384
    %418 = vmatpush.msra.mxu0 %v383
    %419 = vmatpush.msra.mxu0 %v382
    %420 = vmatpush.msra.mxu0 %v381
    %421 = vmatpush.msra.mxu0 %v380
    %422 = vmatpush.msra.mxu0 %v379
    %423 = vmatpush.msra.mxu0 %v378
    %424 = vmatpush.msra.mxu0 %v377
    %425 = vmatmul.f32.gmra.mxu0 %v386
    %v426 = vpop.f32.mrf.mxu0
    %v427 = vadd.f32 0.0, %v426
    %428 = vmatmul.f32.gmra.mxu0 %v389
    %v429 = vpop.f32.mrf.mxu0
    %v430 = vadd.f32 0.0, %v429
    %431 = vmatmul.f32.gmra.mxu0 %v392
    %v432 = vpop.f32.mrf.mxu0
    %v433 = vadd.f32 0.0, %v432
    %434 = vmatmul.f32.gmra.mxu0 %v395
    %v435 = vpop.f32.mrf.mxu0
    %v436 = vadd.f32 0.0, %v435
    %437 = vmatmul.f32.gmra.mxu0 %v398
    %v438 = vpop.f32.mrf.mxu0
    %v439 = vadd.f32 0.0, %v438
    %440 = vmatmul.f32.gmra.mxu0 %v401
    %v441 = vpop.f32.mrf.mxu0
    %v442 = vadd.f32 0.0, %v441
    %443 = vmatmul.f32.gmra.mxu0 %v404
    %v444 = vpop.f32.mrf.mxu0
    %v445 = vadd.f32 0.0, %v444
    %446 = vmatmul.f32.gmra.mxu0 %v407
    %v447 = vpop.f32.mrf.mxu0
    %v448 = vadd.f32 0.0, %v447
    %449 = vdwg.mxu0
    %v450 = vsel %vm97, %v427, -inf
    %451 = vmax.xlane.f32.xlu0 %v450
    %v452 = vpop.xlane.xlu0 %451
    %v453 = vsel %vm97, %v430, -inf
    %454 = vmax.xlane.f32.xlu0 %v453
    %v455 = vpop.xlane.xlu0 %454
    %v456 = vsel %vm97, %v433, -inf
    %457 = vmax.xlane.f32.xlu0 %v456
    %v458 = vpop.xlane.xlu0 %457
    %v459 = vsel %vm97, %v436, -inf
    %460 = vmax.xlane.f32.xlu0 %v459
    %v461 = vpop.xlane.xlu0 %460
    %v462 = vsel %vm97, %v439, -inf
    %463 = vmax.xlane.f32.xlu0 %v462
    %v464 = vpop.xlane.xlu0 %463
    %v465 = vsel %vm97, %v442, -inf
    %466 = vmax.xlane.f32.xlu0 %v465
    %v467 = vpop.xlane.xlu0 %466
    %v468 = vsel %vm97, %v445, -inf
    %469 = vmax.xlane.f32.xlu0 %v468
    %v470 = vpop.xlane.xlu0 %469
    %v471 = vsel %vm97, %v448, -inf
    %472 = vmax.xlane.f32.xlu0 %v471
    %v473 = vpop.xlane.xlu0 %472
    %v474 = vsub.f32 %v427, %v452
    %v475 = vsub.f32 %v430, %v455
    %v476 = vsub.f32 %v433, %v458
    %v477 = vsub.f32 %v436, %v461
    %v478 = vsub.f32 %v439, %v464
    %v479 = vsub.f32 %v442, %v467
    %v480 = vsub.f32 %v445, %v470
    %v481 = vsub.f32 %v448, %v473
    %v482 = vmul.f32 %v474, 1.442695
    %v483 = vpow.pop %v482
    %v484 = vmul.f32 %v475, 1.442695
    %v485 = vpow.pop %v484
    %v486 = vmul.f32 %v476, 1.442695
    %v487 = vpow.pop %v486
    %v488 = vmul.f32 %v477, 1.442695
    %v489 = vpow.pop %v488
    %v490 = vmul.f32 %v478, 1.442695
    %v491 = vpow.pop %v490
    %v492 = vmul.f32 %v479, 1.442695
    %v493 = vpow.pop %v492
    %v494 = vmul.f32 %v480, 1.442695
    %v495 = vpow.pop %v494
    %v496 = vmul.f32 %v481, 1.442695
    %v497 = vpow.pop %v496
    %v498 = vsel %vm97, %v483, 0.0
    %499 = vadd.xlane.f32.xlu0 %v498
    %v500 = vpop.xlane.xlu0 %499
    %v501 = vsel %vm97, %v485, 0.0
    %502 = vadd.xlane.f32.xlu0 %v501
    %v503 = vpop.xlane.xlu0 %502
    %v504 = vsel %vm97, %v487, 0.0
    %505 = vadd.xlane.f32.xlu0 %v504
    %v506 = vpop.xlane.xlu0 %505
    %v507 = vsel %vm97, %v489, 0.0
    %508 = vadd.xlane.f32.xlu0 %v507
    %v509 = vpop.xlane.xlu0 %508
    %v510 = vsel %vm97, %v491, 0.0
    %511 = vadd.xlane.f32.xlu0 %v510
    %v512 = vpop.xlane.xlu0 %511
    %v513 = vsel %vm97, %v493, 0.0
    %514 = vadd.xlane.f32.xlu0 %v513
    %v515 = vpop.xlane.xlu0 %514
    %v516 = vsel %vm97, %v495, 0.0
    %517 = vadd.xlane.f32.xlu0 %v516
    %v518 = vpop.xlane.xlu0 %517
    %v519 = vsel %vm97, %v497, 0.0
    %520 = vadd.xlane.f32.xlu0 %v519
    %v521 = vpop.xlane.xlu0 %520
    %v522 = vrcp.pop %v500
    %v523 = vmul.f32 %v500, %v522
    %v524 = vsub.f32 1.0, %v523
    %v525 = vmul.f32 %v522, %v524
    %v526 = vadd.f32 %v522, %v525
    %vm527 = vweird.f32 %v500
    %vm528 = vweird.f32 %v522
    %vm529 = vmor %vm527, %vm528
    %v530 = vsel %vm529, %v522, %v526
    %v531 = vand.u32 2147483647, %v500
    %vm532 = vcmp.eq.f32.partialorder %v531, 8.507059e+37
    %v533 = vand.u32 %v500, 2147483648
    %v534 = vor.u32 1.1754944e-38, %v533
    %v535 = vsel %vm532, %v534, %v530
    %v536 = vmul.f32 %v483, %v535
    %v537 = vrcp.pop %v503
    %v538 = vmul.f32 %v503, %v537
    %v539 = vsub.f32 1.0, %v538
    %v540 = vmul.f32 %v537, %v539
    %v541 = vadd.f32 %v537, %v540
    %vm542 = vweird.f32 %v503
    %vm543 = vweird.f32 %v537
    %vm544 = vmor %vm542, %vm543
    %v545 = vsel %vm544, %v537, %v541
    %v546 = vand.u32 2147483647, %v503
    %vm547 = vcmp.eq.f32.partialorder %v546, 8.507059e+37
    %v548 = vand.u32 %v503, 2147483648
    %v549 = vor.u32 1.1754944e-38, %v548
    %v550 = vsel %vm547, %v549, %v545
    %v551 = vmul.f32 %v485, %v550
    %v552 = vrcp.pop %v506
    %v553 = vmul.f32 %v506, %v552
    %v554 = vsub.f32 1.0, %v553
    %v555 = vmul.f32 %v552, %v554
    %v556 = vadd.f32 %v552, %v555
    %vm557 = vweird.f32 %v506
    %vm558 = vweird.f32 %v552
    %vm559 = vmor %vm557, %vm558
    %v560 = vsel %vm559, %v552, %v556
    %v561 = vand.u32 2147483647, %v506
    %vm562 = vcmp.eq.f32.partialorder %v561, 8.507059e+37
    %v563 = vand.u32 %v506, 2147483648
    %v564 = vor.u32 1.1754944e-38, %v563
    %v565 = vsel %vm562, %v564, %v560
    %v566 = vmul.f32 %v487, %v565
    %v567 = vrcp.pop %v509
    %v568 = vmul.f32 %v509, %v567
    %v569 = vsub.f32 1.0, %v568
    %v570 = vmul.f32 %v567, %v569
    %v571 = vadd.f32 %v567, %v570
    %vm572 = vweird.f32 %v509
    %vm573 = vweird.f32 %v567
    %vm574 = vmor %vm572, %vm573
    %v575 = vsel %vm574, %v567, %v571
    %v576 = vand.u32 2147483647, %v509
    %vm577 = vcmp.eq.f32.partialorder %v576, 8.507059e+37
    %v578 = vand.u32 %v509, 2147483648
    %v579 = vor.u32 1.1754944e-38, %v578
    %v580 = vsel %vm577, %v579, %v575
    %v581 = vmul.f32 %v489, %v580
    %v582 = vrcp.pop %v512
    %v583 = vmul.f32 %v512, %v582
    %v584 = vsub.f32 1.0, %v583
    %v585 = vmul.f32 %v582, %v584
    %v586 = vadd.f32 %v582, %v585
    %vm587 = vweird.f32 %v512
    %vm588 = vweird.f32 %v582
    %vm589 = vmor %vm587, %vm588
    %v590 = vsel %vm589, %v582, %v586
    %v591 = vand.u32 2147483647, %v512
    %vm592 = vcmp.eq.f32.partialorder %v591, 8.507059e+37
    %v593 = vand.u32 %v512, 2147483648
    %v594 = vor.u32 1.1754944e-38, %v593
    %v595 = vsel %vm592, %v594, %v590
    %v596 = vmul.f32 %v491, %v595
    %v597 = vrcp.pop %v515
    %v598 = vmul.f32 %v515, %v597
    %v599 = vsub.f32 1.0, %v598
    %v600 = vmul.f32 %v597, %v599
    %v601 = vadd.f32 %v597, %v600
    %vm602 = vweird.f32 %v515
    %vm603 = vweird.f32 %v597
    %vm604 = vmor %vm602, %vm603
    %v605 = vsel %vm604, %v597, %v601
    %v606 = vand.u32 2147483647, %v515
    %vm607 = vcmp.eq.f32.partialorder %v606, 8.507059e+37
    %v608 = vand.u32 %v515, 2147483648
    %v609 = vor.u32 1.1754944e-38, %v608
    %v610 = vsel %vm607, %v609, %v605
    %v611 = vmul.f32 %v493, %v610
    %v612 = vrcp.pop %v518
    %v613 = vmul.f32 %v518, %v612
    %v614 = vsub.f32 1.0, %v613
    %v615 = vmul.f32 %v612, %v614
    %v616 = vadd.f32 %v612, %v615
    %vm617 = vweird.f32 %v518
    %vm618 = vweird.f32 %v612
    %vm619 = vmor %vm617, %vm618
    %v620 = vsel %vm619, %v612, %v616
    %v621 = vand.u32 2147483647, %v518
    %vm622 = vcmp.eq.f32.partialorder %v621, 8.507059e+37
    %v623 = vand.u32 %v518, 2147483648
    %v624 = vor.u32 1.1754944e-38, %v623
    %v625 = vsel %vm622, %v624, %v620
    %v626 = vmul.f32 %v495, %v625
    %v627 = vrcp.pop %v521
    %v628 = vmul.f32 %v521, %v627
    %v629 = vsub.f32 1.0, %v628
    %v630 = vmul.f32 %v627, %v629
    %v631 = vadd.f32 %v627, %v630
    %vm632 = vweird.f32 %v521
    %vm633 = vweird.f32 %v627
    %vm634 = vmor %vm632, %vm633
    %v635 = vsel %vm634, %v627, %v631
    %v636 = vand.u32 2147483647, %v521
    %vm637 = vcmp.eq.f32.partialorder %v636, 8.507059e+37
    %v638 = vand.u32 %v521, 2147483648
    %v639 = vor.u32 1.1754944e-38, %v638
    %v640 = vsel %vm637, %v639, %v635
    %v641 = vmul.f32 %v497, %v640
    %s642 = scalar_lea.vmem %s2, 32
    %v643 = vld [vmem:[%s642] sm:$0xff]
    %v644 = vld [vmem:[%s642 + $0x8] sm:$0xff]
    %v645 = vld [vmem:[%s642 + $0x10] sm:$0xff]
    %v646 = vld [vmem:[%s642 + $0x18] sm:$0xff]
    %v648 = vsel %vm97, %v536, 0
    %v651 = vsel %vm97, %v551, 0
    %v654 = vsel %vm97, %v566, 0
    %v657 = vsel %vm97, %v581, 0
    %v660 = vsel %vm97, %v596, 0
    %v663 = vsel %vm97, %v611, 0
    %v666 = vsel %vm97, %v626, 0
    %v669 = vsel %vm97, %v641, 0
    %671 = vmatpush.msra.mxu0 0.0
    %672 = vmatpush.msra.mxu0 0.0
    %673 = vmatpush.msra.mxu0 0.0
    %674 = vmatpush.msra.mxu0 0.0
    %675 = vmatpush.msra.mxu0 0.0
    %676 = vmatpush.msra.mxu0 0.0
    %677 = vmatpush.msra.mxu0 0.0
    %678 = vmatpush.msra.mxu0 0.0
    %679 = vmatpush.msra.mxu0 0.0
    %680 = vmatpush.msra.mxu0 0.0
    %681 = vmatpush.msra.mxu0 0.0
    %682 = vmatpush.msra.mxu0 0.0
    %683 = vmatpush.msra.mxu0 %v646
    %684 = vmatpush.msra.mxu0 %v645
    %685 = vmatpush.msra.mxu0 %v644
    %686 = vmatpush.msra.mxu0 %v643
    %687 = vmatmul.f32.gmra.mxu0 %v648
    %v688 = vpop.f32.mrf.mxu0
    %v689 = vadd.f32 0.0, %v688
    %690 = vmatmul.f32.gmra.mxu0 %v651
    %v691 = vpop.f32.mrf.mxu0
    %v692 = vadd.f32 0.0, %v691
    %693 = vmatmul.f32.gmra.mxu0 %v654
    %v694 = vpop.f32.mrf.mxu0
    %v695 = vadd.f32 0.0, %v694
    %696 = vmatmul.f32.gmra.mxu0 %v657
    %v697 = vpop.f32.mrf.mxu0
    %v698 = vadd.f32 0.0, %v697
    %699 = vmatmul.f32.gmra.mxu0 %v660
    %v700 = vpop.f32.mrf.mxu0
    %v701 = vadd.f32 0.0, %v700
    %702 = vmatmul.f32.gmra.mxu0 %v663
    %v703 = vpop.f32.mrf.mxu0
    %v704 = vadd.f32 0.0, %v703
    %705 = vmatmul.f32.gmra.mxu0 %v666
    %v706 = vpop.f32.mrf.mxu0
    %v707 = vadd.f32 0.0, %v706
    %708 = vmatmul.f32.gmra.mxu0 %v669
    %v709 = vpop.f32.mrf.mxu0
    %v710 = vadd.f32 0.0, %v709
    %711 = vdwg.mxu0
    %s712 = scalar_lea.vmem [#allocation2], 64
    %713 = vst.msk [vmem:[%s712] sm:$0xff] %vm31, %v689
    %714 = vst.msk [vmem:[%s712 + $0x8] sm:$0xff] %vm31, %v692
    %715 = vst.msk [vmem:[%s712 + $0x10] sm:$0xff] %vm31, %v695
    %716 = vst.msk [vmem:[%s712 + $0x18] sm:$0xff] %vm31, %v698
    %717 = vst.msk [vmem:[%s712 + $0x20] sm:$0xff] %vm31, %v701
    %718 = vst.msk [vmem:[%s712 + $0x28] sm:$0xff] %vm31, %v704
    %719 = vst.msk [vmem:[%s712 + $0x30] sm:$0xff] %vm31, %v707
    %720 = vst.msk [vmem:[%s712 + $0x38] sm:$0xff] %vm31, %v710
    %s721 = scalar_lea.vmem %s0, 128
    %v722 = vld [vmem:[%s721] sm:$0xff]
    %v723 = vld [vmem:[%s721 + $0x8] sm:$0xff]
    %v724 = vld [vmem:[%s721 + $0x10] sm:$0xff]
    %v725 = vld [vmem:[%s721 + $0x18] sm:$0xff]
    %v726 = vld [vmem:[%s721 + $0x20] sm:$0xff]
    %v727 = vld [vmem:[%s721 + $0x28] sm:$0xff]
    %v728 = vld [vmem:[%s721 + $0x30] sm:$0xff]
    %v729 = vld [vmem:[%s721 + $0x38] sm:$0xff]
    %s730 = scalar_lea.vmem %s1, 128
    %v731 = vld [vmem:[%s730] sm:$0xff]
    %v732 = vld [vmem:[%s730 + $0x8] sm:$0xff]
    %v733 = vld [vmem:[%s730 + $0x10] sm:$0xff]
    %v734 = vld [vmem:[%s730 + $0x18] sm:$0xff]
    %v735 = vld [vmem:[%s730 + $0x20] sm:$0xff]
    %v736 = vld [vmem:[%s730 + $0x28] sm:$0xff]
    %v737 = vld [vmem:[%s730 + $0x30] sm:$0xff]
    %v738 = vld [vmem:[%s730 + $0x38] sm:$0xff]
    %v740 = vsel %vm31, %v722, 0
    %v743 = vsel %vm31, %v723, 0
    %v746 = vsel %vm31, %v724, 0
    %v749 = vsel %vm31, %v725, 0
    %v752 = vsel %vm31, %v726, 0
    %v755 = vsel %vm31, %v727, 0
    %v758 = vsel %vm31, %v728, 0
    %v761 = vsel %vm31, %v729, 0
    %763 = vmatpush.msra.mxu0 0.0
    %764 = vmatpush.msra.mxu0 0.0
    %765 = vmatpush.msra.mxu0 0.0
    %766 = vmatpush.msra.mxu0 0.0
    %767 = vmatpush.msra.mxu0 0.0
    %768 = vmatpush.msra.mxu0 0.0
    %769 = vmatpush.msra.mxu0 0.0
    %770 = vmatpush.msra.mxu0 0.0
    %771 = vmatpush.msra.mxu0 %v738
    %772 = vmatpush.msra.mxu0 %v737
    %773 = vmatpush.msra.mxu0 %v736
    %774 = vmatpush.msra.mxu0 %v735
    %775 = vmatpush.msra.mxu0 %v734
    %776 = vmatpush.msra.mxu0 %v733
    %777 = vmatpush.msra.mxu0 %v732
    %778 = vmatpush.msra.mxu0 %v731
    %779 = vmatmul.f32.gmra.mxu0 %v740
    %v780 = vpop.f32.mrf.mxu0
    %v781 = vadd.f32 0.0, %v780
    %782 = vmatmul.f32.gmra.mxu0 %v743
    %v783 = vpop.f32.mrf.mxu0
    %v784 = vadd.f32 0.0, %v783
    %785 = vmatmul.f32.gmra.mxu0 %v746
    %v786 = vpop.f32.mrf.mxu0
    %v787 = vadd.f32 0.0, %v786
    %788 = vmatmul.f32.gmra.mxu0 %v749
    %v789 = vpop.f32.mrf.mxu0
    %v790 = vadd.f32 0.0, %v789
    %791 = vmatmul.f32.gmra.mxu0 %v752
    %v792 = vpop.f32.mrf.mxu0
    %v793 = vadd.f32 0.0, %v792
    %794 = vmatmul.f32.gmra.mxu0 %v755
    %v795 = vpop.f32.mrf.mxu0
    %v796 = vadd.f32 0.0, %v795
    %797 = vmatmul.f32.gmra.mxu0 %v758
    %v798 = vpop.f32.mrf.mxu0
    %v799 = vadd.f32 0.0, %v798
    %800 = vmatmul.f32.gmra.mxu0 %v761
    %v801 = vpop.f32.mrf.mxu0
    %v802 = vadd.f32 0.0, %v801
    %803 = vdwg.mxu0
    %v804 = vsel %vm97, %v781, -inf
    %805 = vmax.xlane.f32.xlu0 %v804
    %v806 = vpop.xlane.xlu0 %805
    %v807 = vsel %vm97, %v784, -inf
    %808 = vmax.xlane.f32.xlu0 %v807
    %v809 = vpop.xlane.xlu0 %808
    %v810 = vsel %vm97, %v787, -inf
    %811 = vmax.xlane.f32.xlu0 %v810
    %v812 = vpop.xlane.xlu0 %811
    %v813 = vsel %vm97, %v790, -inf
    %814 = vmax.xlane.f32.xlu0 %v813
    %v815 = vpop.xlane.xlu0 %814
    %v816 = vsel %vm97, %v793, -inf
    %817 = vmax.xlane.f32.xlu0 %v816
    %v818 = vpop.xlane.xlu0 %817
    %v819 = vsel %vm97, %v796, -inf
    %820 = vmax.xlane.f32.xlu0 %v819
    %v821 = vpop.xlane.xlu0 %820
    %v822 = vsel %vm97, %v799, -inf
    %823 = vmax.xlane.f32.xlu0 %v822
    %v824 = vpop.xlane.xlu0 %823
    %v825 = vsel %vm97, %v802, -inf
    %826 = vmax.xlane.f32.xlu0 %v825
    %v827 = vpop.xlane.xlu0 %826
    %v828 = vsub.f32 %v781, %v806
    %v829 = vsub.f32 %v784, %v809
    %v830 = vsub.f32 %v787, %v812
    %v831 = vsub.f32 %v790, %v815
    %v832 = vsub.f32 %v793, %v818
    %v833 = vsub.f32 %v796, %v821
    %v834 = vsub.f32 %v799, %v824
    %v835 = vsub.f32 %v802, %v827
    %v836 = vmul.f32 %v828, 1.442695
    %v837 = vpow.pop %v836
    %v838 = vmul.f32 %v829, 1.442695
    %v839 = vpow.pop %v838
    %v840 = vmul.f32 %v830, 1.442695
    %v841 = vpow.pop %v840
    %v842 = vmul.f32 %v831, 1.442695
    %v843 = vpow.pop %v842
    %v844 = vmul.f32 %v832, 1.442695
    %v845 = vpow.pop %v844
    %v846 = vmul.f32 %v833, 1.442695
    %v847 = vpow.pop %v846
    %v848 = vmul.f32 %v834, 1.442695
    %v849 = vpow.pop %v848
    %v850 = vmul.f32 %v835, 1.442695
    %v851 = vpow.pop %v850
    %v852 = vsel %vm97, %v837, 0.0
    %853 = vadd.xlane.f32.xlu0 %v852
    %v854 = vpop.xlane.xlu0 %853
    %v855 = vsel %vm97, %v839, 0.0
    %856 = vadd.xlane.f32.xlu0 %v855
    %v857 = vpop.xlane.xlu0 %856
    %v858 = vsel %vm97, %v841, 0.0
    %859 = vadd.xlane.f32.xlu0 %v858
    %v860 = vpop.xlane.xlu0 %859
    %v861 = vsel %vm97, %v843, 0.0
    %862 = vadd.xlane.f32.xlu0 %v861
    %v863 = vpop.xlane.xlu0 %862
    %v864 = vsel %vm97, %v845, 0.0
    %865 = vadd.xlane.f32.xlu0 %v864
    %v866 = vpop.xlane.xlu0 %865
    %v867 = vsel %vm97, %v847, 0.0
    %868 = vadd.xlane.f32.xlu0 %v867
    %v869 = vpop.xlane.xlu0 %868
    %v870 = vsel %vm97, %v849, 0.0
    %871 = vadd.xlane.f32.xlu0 %v870
    %v872 = vpop.xlane.xlu0 %871
    %v873 = vsel %vm97, %v851, 0.0
    %874 = vadd.xlane.f32.xlu0 %v873
    %v875 = vpop.xlane.xlu0 %874
    %v876 = vrcp.pop %v854
    %v877 = vmul.f32 %v854, %v876
    %v878 = vsub.f32 1.0, %v877
    %v879 = vmul.f32 %v876, %v878
    %v880 = vadd.f32 %v876, %v879
    %vm881 = vweird.f32 %v854
    %vm882 = vweird.f32 %v876
    %vm883 = vmor %vm881, %vm882
    %v884 = vsel %vm883, %v876, %v880
    %v885 = vand.u32 2147483647, %v854
    %vm886 = vcmp.eq.f32.partialorder %v885, 8.507059e+37
    %v887 = vand.u32 %v854, 2147483648
    %v888 = vor.u32 1.1754944e-38, %v887
    %v889 = vsel %vm886, %v888, %v884
    %v890 = vmul.f32 %v837, %v889
    %v891 = vrcp.pop %v857
    %v892 = vmul.f32 %v857, %v891
    %v893 = vsub.f32 1.0, %v892
    %v894 = vmul.f32 %v891, %v893
    %v895 = vadd.f32 %v891, %v894
    %vm896 = vweird.f32 %v857
    %vm897 = vweird.f32 %v891
    %vm898 = vmor %vm896, %vm897
    %v899 = vsel %vm898, %v891, %v895
    %v900 = vand.u32 2147483647, %v857
    %vm901 = vcmp.eq.f32.partialorder %v900, 8.507059e+37
    %v902 = vand.u32 %v857, 2147483648
    %v903 = vor.u32 1.1754944e-38, %v902
    %v904 = vsel %vm901, %v903, %v899
    %v905 = vmul.f32 %v839, %v904
    %v906 = vrcp.pop %v860
    %v907 = vmul.f32 %v860, %v906
    %v908 = vsub.f32 1.0, %v907
    %v909 = vmul.f32 %v906, %v908
    %v910 = vadd.f32 %v906, %v909
    %vm911 = vweird.f32 %v860
    %vm912 = vweird.f32 %v906
    %vm913 = vmor %vm911, %vm912
    %v914 = vsel %vm913, %v906, %v910
    %v915 = vand.u32 2147483647, %v860
    %vm916 = vcmp.eq.f32.partialorder %v915, 8.507059e+37
    %v917 = vand.u32 %v860, 2147483648
    %v918 = vor.u32 1.1754944e-38, %v917
    %v919 = vsel %vm916, %v918, %v914
    %v920 = vmul.f32 %v841, %v919
    %v921 = vrcp.pop %v863
    %v922 = vmul.f32 %v863, %v921
    %v923 = vsub.f32 1.0, %v922
    %v924 = vmul.f32 %v921, %v923
    %v925 = vadd.f32 %v921, %v924
    %vm926 = vweird.f32 %v863
    %vm927 = vweird.f32 %v921
    %vm928 = vmor %vm926, %vm927
    %v929 = vsel %vm928, %v921, %v925
    %v930 = vand.u32 2147483647, %v863
    %vm931 = vcmp.eq.f32.partialorder %v930, 8.507059e+37
    %v932 = vand.u32 %v863, 2147483648
    %v933 = vor.u32 1.1754944e-38, %v932
    %v934 = vsel %vm931, %v933, %v929
    %v935 = vmul.f32 %v843, %v934
    %v936 = vrcp.pop %v866
    %v937 = vmul.f32 %v866, %v936
    %v938 = vsub.f32 1.0, %v937
    %v939 = vmul.f32 %v936, %v938
    %v940 = vadd.f32 %v936, %v939
    %vm941 = vweird.f32 %v866
    %vm942 = vweird.f32 %v936
    %vm943 = vmor %vm941, %vm942
    %v944 = vsel %vm943, %v936, %v940
    %v945 = vand.u32 2147483647, %v866
    %vm946 = vcmp.eq.f32.partialorder %v945, 8.507059e+37
    %v947 = vand.u32 %v866, 2147483648
    %v948 = vor.u32 1.1754944e-38, %v947
    %v949 = vsel %vm946, %v948, %v944
    %v950 = vmul.f32 %v845, %v949
    %v951 = vrcp.pop %v869
    %v952 = vmul.f32 %v869, %v951
    %v953 = vsub.f32 1.0, %v952
    %v954 = vmul.f32 %v951, %v953
    %v955 = vadd.f32 %v951, %v954
    %vm956 = vweird.f32 %v869
    %vm957 = vweird.f32 %v951
    %vm958 = vmor %vm956, %vm957
    %v959 = vsel %vm958, %v951, %v955
    %v960 = vand.u32 2147483647, %v869
    %vm961 = vcmp.eq.f32.partialorder %v960, 8.507059e+37
    %v962 = vand.u32 %v869, 2147483648
    %v963 = vor.u32 1.1754944e-38, %v962
    %v964 = vsel %vm961, %v963, %v959
    %v965 = vmul.f32 %v847, %v964
    %v966 = vrcp.pop %v872
    %v967 = vmul.f32 %v872, %v966
    %v968 = vsub.f32 1.0, %v967
    %v969 = vmul.f32 %v966, %v968
    %v970 = vadd.f32 %v966, %v969
    %vm971 = vweird.f32 %v872
    %vm972 = vweird.f32 %v966
    %vm973 = vmor %vm971, %vm972
    %v974 = vsel %vm973, %v966, %v970
    %v975 = vand.u32 2147483647, %v872
    %vm976 = vcmp.eq.f32.partialorder %v975, 8.507059e+37
    %v977 = vand.u32 %v872, 2147483648
    %v978 = vor.u32 1.1754944e-38, %v977
    %v979 = vsel %vm976, %v978, %v974
    %v980 = vmul.f32 %v849, %v979
    %v981 = vrcp.pop %v875
    %v982 = vmul.f32 %v875, %v981
    %v983 = vsub.f32 1.0, %v982
    %v984 = vmul.f32 %v981, %v983
    %v985 = vadd.f32 %v981, %v984
    %vm986 = vweird.f32 %v875
    %vm987 = vweird.f32 %v981
    %vm988 = vmor %vm986, %vm987
    %v989 = vsel %vm988, %v981, %v985
    %v990 = vand.u32 2147483647, %v875
    %vm991 = vcmp.eq.f32.partialorder %v990, 8.507059e+37
    %v992 = vand.u32 %v875, 2147483648
    %v993 = vor.u32 1.1754944e-38, %v992
    %v994 = vsel %vm991, %v993, %v989
    %v995 = vmul.f32 %v851, %v994
    %s996 = scalar_lea.vmem %s2, 64
    %v997 = vld [vmem:[%s996] sm:$0xff]
    %v998 = vld [vmem:[%s996 + $0x8] sm:$0xff]
    %v999 = vld [vmem:[%s996 + $0x10] sm:$0xff]
    %v1000 = vld [vmem:[%s996 + $0x18] sm:$0xff]
    %v1002 = vsel %vm97, %v890, 0
    %v1005 = vsel %vm97, %v905, 0
    %v1008 = vsel %vm97, %v920, 0
    %v1011 = vsel %vm97, %v935, 0
    %v1014 = vsel %vm97, %v950, 0
    %v1017 = vsel %vm97, %v965, 0
    %v1020 = vsel %vm97, %v980, 0
    %v1023 = vsel %vm97, %v995, 0
    %1025 = vmatpush.msra.mxu0 0.0
    %1026 = vmatpush.msra.mxu0 0.0
    %1027 = vmatpush.msra.mxu0 0.0
    %1028 = vmatpush.msra.mxu0 0.0
    %1029 = vmatpush.msra.mxu0 0.0
    %1030 = vmatpush.msra.mxu0 0.0
    %1031 = vmatpush.msra.mxu0 0.0
    %1032 = vmatpush.msra.mxu0 0.0
    %1033 = vmatpush.msra.mxu0 0.0
    %1034 = vmatpush.msra.mxu0 0.0
    %1035 = vmatpush.msra.mxu0 0.0
    %1036 = vmatpush.msra.mxu0 0.0
    %1037 = vmatpush.msra.mxu0 %v1000
    %1038 = vmatpush.msra.mxu0 %v999
    %1039 = vmatpush.msra.mxu0 %v998
    %1040 = vmatpush.msra.mxu0 %v997
    %1041 = vmatmul.f32.gmra.mxu0 %v1002
    %v1042 = vpop.f32.mrf.mxu0
    %v1043 = vadd.f32 0.0, %v1042
    %1044 = vmatmul.f32.gmra.mxu0 %v1005
    %v1045 = vpop.f32.mrf.mxu0
    %v1046 = vadd.f32 0.0, %v1045
    %1047 = vmatmul.f32.gmra.mxu0 %v1008
    %v1048 = vpop.f32.mrf.mxu0
    %v1049 = vadd.f32 0.0, %v1048
    %1050 = vmatmul.f32.gmra.mxu0 %v1011
    %v1051 = vpop.f32.mrf.mxu0
    %v1052 = vadd.f32 0.0, %v1051
    %1053 = vmatmul.f32.gmra.mxu0 %v1014
    %v1054 = vpop.f32.mrf.mxu0
    %v1055 = vadd.f32 0.0, %v1054
    %1056 = vmatmul.f32.gmra.mxu0 %v1017
    %v1057 = vpop.f32.mrf.mxu0
    %v1058 = vadd.f32 0.0, %v1057
    %1059 = vmatmul.f32.gmra.mxu0 %v1020
    %v1060 = vpop.f32.mrf.mxu0
    %v1061 = vadd.f32 0.0, %v1060
    %1062 = vmatmul.f32.gmra.mxu0 %v1023
    %v1063 = vpop.f32.mrf.mxu0
    %v1064 = vadd.f32 0.0, %v1063
    %1065 = vdwg.mxu0
    %s1066 = scalar_lea.vmem [#allocation2], 128
    %1067 = vst.msk [vmem:[%s1066] sm:$0xff] %vm31, %v1043
    %1068 = vst.msk [vmem:[%s1066 + $0x8] sm:$0xff] %vm31, %v1046
    %1069 = vst.msk [vmem:[%s1066 + $0x10] sm:$0xff] %vm31, %v1049
    %1070 = vst.msk [vmem:[%s1066 + $0x18] sm:$0xff] %vm31, %v1052
    %1071 = vst.msk [vmem:[%s1066 + $0x20] sm:$0xff] %vm31, %v1055
    %1072 = vst.msk [vmem:[%s1066 + $0x28] sm:$0xff] %vm31, %v1058
    %1073 = vst.msk [vmem:[%s1066 + $0x30] sm:$0xff] %vm31, %v1061
    %1074 = vst.msk [vmem:[%s1066 + $0x38] sm:$0xff] %vm31, %v1064
    %s1075 = scalar_lea.vmem %s0, 192
    %v1076 = vld [vmem:[%s1075] sm:$0xff]
    %v1077 = vld [vmem:[%s1075 + $0x8] sm:$0xff]
    %v1078 = vld [vmem:[%s1075 + $0x10] sm:$0xff]
    %v1079 = vld [vmem:[%s1075 + $0x18] sm:$0xff]
    %v1080 = vld [vmem:[%s1075 + $0x20] sm:$0xff]
    %v1081 = vld [vmem:[%s1075 + $0x28] sm:$0xff]
    %v1082 = vld [vmem:[%s1075 + $0x30] sm:$0xff]
    %v1083 = vld [vmem:[%s1075 + $0x38] sm:$0xff]
    %s1084 = scalar_lea.vmem %s1, 192
    %v1085 = vld [vmem:[%s1084] sm:$0xff]
    %v1086 = vld [vmem:[%s1084 + $0x8] sm:$0xff]
    %v1087 = vld [vmem:[%s1084 + $0x10] sm:$0xff]
    %v1088 = vld [vmem:[%s1084 + $0x18] sm:$0xff]
    %v1089 = vld [vmem:[%s1084 + $0x20] sm:$0xff]
    %v1090 = vld [vmem:[%s1084 + $0x28] sm:$0xff]
    %v1091 = vld [vmem:[%s1084 + $0x30] sm:$0xff]
    %v1092 = vld [vmem:[%s1084 + $0x38] sm:$0xff]
    %v1094 = vsel %vm31, %v1076, 0
    %v1097 = vsel %vm31, %v1077, 0
    %v1100 = vsel %vm31, %v1078, 0
    %v1103 = vsel %vm31, %v1079, 0
    %v1106 = vsel %vm31, %v1080, 0
    %v1109 = vsel %vm31, %v1081, 0
    %v1112 = vsel %vm31, %v1082, 0
    %v1115 = vsel %vm31, %v1083, 0
    %1117 = vmatpush.msra.mxu0 0.0
    %1118 = vmatpush.msra.mxu0 0.0
    %1119 = vmatpush.msra.mxu0 0.0
    %1120 = vmatpush.msra.mxu0 0.0
    %1121 = vmatpush.msra.mxu0 0.0
    %1122 = vmatpush.msra.mxu0 0.0
    %1123 = vmatpush.msra.mxu0 0.0
    %1124 = vmatpush.msra.mxu0 0.0
    %1125 = vmatpush.msra.mxu0 %v1092
    %1126 = vmatpush.msra.mxu0 %v1091
    %1127 = vmatpush.msra.mxu0 %v1090
    %1128 = vmatpush.msra.mxu0 %v1089
    %1129 = vmatpush.msra.mxu0 %v1088
    %1130 = vmatpush.msra.mxu0 %v1087
    %1131 = vmatpush.msra.mxu0 %v1086
    %1132 = vmatpush.msra.mxu0 %v1085
    %1133 = vmatmul.f32.gmra.mxu0 %v1094
    %v1134 = vpop.f32.mrf.mxu0
    %v1135 = vadd.f32 0.0, %v1134
    %1136 = vmatmul.f32.gmra.mxu0 %v1097
    %v1137 = vpop.f32.mrf.mxu0
    %v1138 = vadd.f32 0.0, %v1137
    %1139 = vmatmul.f32.gmra.mxu0 %v1100
    %v1140 = vpop.f32.mrf.mxu0
    %v1141 = vadd.f32 0.0, %v1140
    %1142 = vmatmul.f32.gmra.mxu0 %v1103
    %v1143 = vpop.f32.mrf.mxu0
    %v1144 = vadd.f32 0.0, %v1143
    %1145 = vmatmul.f32.gmra.mxu0 %v1106
    %v1146 = vpop.f32.mrf.mxu0
    %v1147 = vadd.f32 0.0, %v1146
    %1148 = vmatmul.f32.gmra.mxu0 %v1109
    %v1149 = vpop.f32.mrf.mxu0
    %v1150 = vadd.f32 0.0, %v1149
    %1151 = vmatmul.f32.gmra.mxu0 %v1112
    %v1152 = vpop.f32.mrf.mxu0
    %v1153 = vadd.f32 0.0, %v1152
    %1154 = vmatmul.f32.gmra.mxu0 %v1115
    %v1155 = vpop.f32.mrf.mxu0
    %v1156 = vadd.f32 0.0, %v1155
    %1157 = vdwg.mxu0
    %v1158 = vsel %vm97, %v1135, -inf
    %1159 = vmax.xlane.f32.xlu0 %v1158
    %v1160 = vpop.xlane.xlu0 %1159
    %v1161 = vsel %vm97, %v1138, -inf
    %1162 = vmax.xlane.f32.xlu0 %v1161
    %v1163 = vpop.xlane.xlu0 %1162
    %v1164 = vsel %vm97, %v1141, -inf
    %1165 = vmax.xlane.f32.xlu0 %v1164
    %v1166 = vpop.xlane.xlu0 %1165
    %v1167 = vsel %vm97, %v1144, -inf
    %1168 = vmax.xlane.f32.xlu0 %v1167
    %v1169 = vpop.xlane.xlu0 %1168
    %v1170 = vsel %vm97, %v1147, -inf
    %1171 = vmax.xlane.f32.xlu0 %v1170
    %v1172 = vpop.xlane.xlu0 %1171
    %v1173 = vsel %vm97, %v1150, -inf
    %1174 = vmax.xlane.f32.xlu0 %v1173
    %v1175 = vpop.xlane.xlu0 %1174
    %v1176 = vsel %vm97, %v1153, -inf
    %1177 = vmax.xlane.f32.xlu0 %v1176
    %v1178 = vpop.xlane.xlu0 %1177
    %v1179 = vsel %vm97, %v1156, -inf
    %1180 = vmax.xlane.f32.xlu0 %v1179
    %v1181 = vpop.xlane.xlu0 %1180
    %v1182 = vsub.f32 %v1135, %v1160
    %v1183 = vsub.f32 %v1138, %v1163
    %v1184 = vsub.f32 %v1141, %v1166
    %v1185 = vsub.f32 %v1144, %v1169
    %v1186 = vsub.f32 %v1147, %v1172
    %v1187 = vsub.f32 %v1150, %v1175
    %v1188 = vsub.f32 %v1153, %v1178
    %v1189 = vsub.f32 %v1156, %v1181
    %v1190 = vmul.f32 %v1182, 1.442695
    %v1191 = vpow.pop %v1190
    %v1192 = vmul.f32 %v1183, 1.442695
    %v1193 = vpow.pop %v1192
    %v1194 = vmul.f32 %v1184, 1.442695
    %v1195 = vpow.pop %v1194
    %v1196 = vmul.f32 %v1185, 1.442695
    %v1197 = vpow.pop %v1196
    %v1198 = vmul.f32 %v1186, 1.442695
    %v1199 = vpow.pop %v1198
    %v1200 = vmul.f32 %v1187, 1.442695
    %v1201 = vpow.pop %v1200
    %v1202 = vmul.f32 %v1188, 1.442695
    %v1203 = vpow.pop %v1202
    %v1204 = vmul.f32 %v1189, 1.442695
    %v1205 = vpow.pop %v1204
    %v1206 = vsel %vm97, %v1191, 0.0
    %1207 = vadd.xlane.f32.xlu0 %v1206
    %v1208 = vpop.xlane.xlu0 %1207
    %v1209 = vsel %vm97, %v1193, 0.0
    %1210 = vadd.xlane.f32.xlu0 %v1209
    %v1211 = vpop.xlane.xlu0 %1210
    %v1212 = vsel %vm97, %v1195, 0.0
    %1213 = vadd.xlane.f32.xlu0 %v1212
    %v1214 = vpop.xlane.xlu0 %1213
    %v1215 = vsel %vm97, %v1197, 0.0
    %1216 = vadd.xlane.f32.xlu0 %v1215
    %v1217 = vpop.xlane.xlu0 %1216
    %v1218 = vsel %vm97, %v1199, 0.0
    %1219 = vadd.xlane.f32.xlu0 %v1218
    %v1220 = vpop.xlane.xlu0 %1219
    %v1221 = vsel %vm97, %v1201, 0.0
    %1222 = vadd.xlane.f32.xlu0 %v1221
    %v1223 = vpop.xlane.xlu0 %1222
    %v1224 = vsel %vm97, %v1203, 0.0
    %1225 = vadd.xlane.f32.xlu0 %v1224
    %v1226 = vpop.xlane.xlu0 %1225
    %v1227 = vsel %vm97, %v1205, 0.0
    %1228 = vadd.xlane.f32.xlu0 %v1227
    %v1229 = vpop.xlane.xlu0 %1228
    %v1230 = vrcp.pop %v1208
    %v1231 = vmul.f32 %v1208, %v1230
    %v1232 = vsub.f32 1.0, %v1231
    %v1233 = vmul.f32 %v1230, %v1232
    %v1234 = vadd.f32 %v1230, %v1233
    %vm1235 = vweird.f32 %v1208
    %vm1236 = vweird.f32 %v1230
    %vm1237 = vmor %vm1235, %vm1236
    %v1238 = vsel %vm1237, %v1230, %v1234
    %v1239 = vand.u32 2147483647, %v1208
    %vm1240 = vcmp.eq.f32.partialorder %v1239, 8.507059e+37
    %v1241 = vand.u32 %v1208, 2147483648
    %v1242 = vor.u32 1.1754944e-38, %v1241
    %v1243 = vsel %vm1240, %v1242, %v1238
    %v1244 = vmul.f32 %v1191, %v1243
    %v1245 = vrcp.pop %v1211
    %v1246 = vmul.f32 %v1211, %v1245
    %v1247 = vsub.f32 1.0, %v1246
    %v1248 = vmul.f32 %v1245, %v1247
    %v1249 = vadd.f32 %v1245, %v1248
    %vm1250 = vweird.f32 %v1211
    %vm1251 = vweird.f32 %v1245
    %vm1252 = vmor %vm1250, %vm1251
    %v1253 = vsel %vm1252, %v1245, %v1249
    %v1254 = vand.u32 2147483647, %v1211
    %vm1255 = vcmp.eq.f32.partialorder %v1254, 8.507059e+37
    %v1256 = vand.u32 %v1211, 2147483648
    %v1257 = vor.u32 1.1754944e-38, %v1256
    %v1258 = vsel %vm1255, %v1257, %v1253
    %v1259 = vmul.f32 %v1193, %v1258
    %v1260 = vrcp.pop %v1214
    %v1261 = vmul.f32 %v1214, %v1260
    %v1262 = vsub.f32 1.0, %v1261
    %v1263 = vmul.f32 %v1260, %v1262
    %v1264 = vadd.f32 %v1260, %v1263
    %vm1265 = vweird.f32 %v1214
    %vm1266 = vweird.f32 %v1260
    %vm1267 = vmor %vm1265, %vm1266
    %v1268 = vsel %vm1267, %v1260, %v1264
    %v1269 = vand.u32 2147483647, %v1214
    %vm1270 = vcmp.eq.f32.partialorder %v1269, 8.507059e+37
    %v1271 = vand.u32 %v1214, 2147483648
    %v1272 = vor.u32 1.1754944e-38, %v1271
    %v1273 = vsel %vm1270, %v1272, %v1268
    %v1274 = vmul.f32 %v1195, %v1273
    %v1275 = vrcp.pop %v1217
    %v1276 = vmul.f32 %v1217, %v1275
    %v1277 = vsub.f32 1.0, %v1276
    %v1278 = vmul.f32 %v1275, %v1277
    %v1279 = vadd.f32 %v1275, %v1278
    %vm1280 = vweird.f32 %v1217
    %vm1281 = vweird.f32 %v1275
    %vm1282 = vmor %vm1280, %vm1281
    %v1283 = vsel %vm1282, %v1275, %v1279
    %v1284 = vand.u32 2147483647, %v1217
    %vm1285 = vcmp.eq.f32.partialorder %v1284, 8.507059e+37
    %v1286 = vand.u32 %v1217, 2147483648
    %v1287 = vor.u32 1.1754944e-38, %v1286
    %v1288 = vsel %vm1285, %v1287, %v1283
    %v1289 = vmul.f32 %v1197, %v1288
    %v1290 = vrcp.pop %v1220
    %v1291 = vmul.f32 %v1220, %v1290
    %v1292 = vsub.f32 1.0, %v1291
    %v1293 = vmul.f32 %v1290, %v1292
    %v1294 = vadd.f32 %v1290, %v1293
    %vm1295 = vweird.f32 %v1220
    %vm1296 = vweird.f32 %v1290
    %vm1297 = vmor %vm1295, %vm1296
    %v1298 = vsel %vm1297, %v1290, %v1294
    %v1299 = vand.u32 2147483647, %v1220
    %vm1300 = vcmp.eq.f32.partialorder %v1299, 8.507059e+37
    %v1301 = vand.u32 %v1220, 2147483648
    %v1302 = vor.u32 1.1754944e-38, %v1301
    %v1303 = vsel %vm1300, %v1302, %v1298
    %v1304 = vmul.f32 %v1199, %v1303
    %v1305 = vrcp.pop %v1223
    %v1306 = vmul.f32 %v1223, %v1305
    %v1307 = vsub.f32 1.0, %v1306
    %v1308 = vmul.f32 %v1305, %v1307
    %v1309 = vadd.f32 %v1305, %v1308
    %vm1310 = vweird.f32 %v1223
    %vm1311 = vweird.f32 %v1305
    %vm1312 = vmor %vm1310, %vm1311
    %v1313 = vsel %vm1312, %v1305, %v1309
    %v1314 = vand.u32 2147483647, %v1223
    %vm1315 = vcmp.eq.f32.partialorder %v1314, 8.507059e+37
    %v1316 = vand.u32 %v1223, 2147483648
    %v1317 = vor.u32 1.1754944e-38, %v1316
    %v1318 = vsel %vm1315, %v1317, %v1313
    %v1319 = vmul.f32 %v1201, %v1318
    %v1320 = vrcp.pop %v1226
    %v1321 = vmul.f32 %v1226, %v1320
    %v1322 = vsub.f32 1.0, %v1321
    %v1323 = vmul.f32 %v1320, %v1322
    %v1324 = vadd.f32 %v1320, %v1323
    %vm1325 = vweird.f32 %v1226
    %vm1326 = vweird.f32 %v1320
    %vm1327 = vmor %vm1325, %vm1326
    %v1328 = vsel %vm1327, %v1320, %v1324
    %v1329 = vand.u32 2147483647, %v1226
    %vm1330 = vcmp.eq.f32.partialorder %v1329, 8.507059e+37
    %v1331 = vand.u32 %v1226, 2147483648
    %v1332 = vor.u32 1.1754944e-38, %v1331
    %v1333 = vsel %vm1330, %v1332, %v1328
    %v1334 = vmul.f32 %v1203, %v1333
    %v1335 = vrcp.pop %v1229
    %v1336 = vmul.f32 %v1229, %v1335
    %v1337 = vsub.f32 1.0, %v1336
    %v1338 = vmul.f32 %v1335, %v1337
    %v1339 = vadd.f32 %v1335, %v1338
    %vm1340 = vweird.f32 %v1229
    %vm1341 = vweird.f32 %v1335
    %vm1342 = vmor %vm1340, %vm1341
    %v1343 = vsel %vm1342, %v1335, %v1339
    %v1344 = vand.u32 2147483647, %v1229
    %vm1345 = vcmp.eq.f32.partialorder %v1344, 8.507059e+37
    %v1346 = vand.u32 %v1229, 2147483648
    %v1347 = vor.u32 1.1754944e-38, %v1346
    %v1348 = vsel %vm1345, %v1347, %v1343
    %v1349 = vmul.f32 %v1205, %v1348
    %s1350 = scalar_lea.vmem %s2, 96
    %v1351 = vld [vmem:[%s1350] sm:$0xff]
    %v1352 = vld [vmem:[%s1350 + $0x8] sm:$0xff]
    %v1353 = vld [vmem:[%s1350 + $0x10] sm:$0xff]
    %v1354 = vld [vmem:[%s1350 + $0x18] sm:$0xff]
    %v1356 = vsel %vm97, %v1244, 0
    %v1359 = vsel %vm97, %v1259, 0
    %v1362 = vsel %vm97, %v1274, 0
    %v1365 = vsel %vm97, %v1289, 0
    %v1368 = vsel %vm97, %v1304, 0
    %v1371 = vsel %vm97, %v1319, 0
    %v1374 = vsel %vm97, %v1334, 0
    %v1377 = vsel %vm97, %v1349, 0
    %1379 = vmatpush.msra.mxu0 0.0
    %1380 = vmatpush.msra.mxu0 0.0
    %1381 = vmatpush.msra.mxu0 0.0
    %1382 = vmatpush.msra.mxu0 0.0
    %1383 = vmatpush.msra.mxu0 0.0
    %1384 = vmatpush.msra.mxu0 0.0
    %1385 = vmatpush.msra.mxu0 0.0
    %1386 = vmatpush.msra.mxu0 0.0
    %1387 = vmatpush.msra.mxu0 0.0
    %1388 = vmatpush.msra.mxu0 0.0
    %1389 = vmatpush.msra.mxu0 0.0
    %1390 = vmatpush.msra.mxu0 0.0
    %1391 = vmatpush.msra.mxu0 %v1354
    %1392 = vmatpush.msra.mxu0 %v1353
    %1393 = vmatpush.msra.mxu0 %v1352
    %1394 = vmatpush.msra.mxu0 %v1351
    %1395 = vmatmul.f32.gmra.mxu0 %v1356
    %v1396 = vpop.f32.mrf.mxu0
    %v1397 = vadd.f32 0.0, %v1396
    %1398 = vmatmul.f32.gmra.mxu0 %v1359
    %v1399 = vpop.f32.mrf.mxu0
    %v1400 = vadd.f32 0.0, %v1399
    %1401 = vmatmul.f32.gmra.mxu0 %v1362
    %v1402 = vpop.f32.mrf.mxu0
    %v1403 = vadd.f32 0.0, %v1402
    %1404 = vmatmul.f32.gmra.mxu0 %v1365
    %v1405 = vpop.f32.mrf.mxu0
    %v1406 = vadd.f32 0.0, %v1405
    %1407 = vmatmul.f32.gmra.mxu0 %v1368
    %v1408 = vpop.f32.mrf.mxu0
    %v1409 = vadd.f32 0.0, %v1408
    %1410 = vmatmul.f32.gmra.mxu0 %v1371
    %v1411 = vpop.f32.mrf.mxu0
    %v1412 = vadd.f32 0.0, %v1411
    %1413 = vmatmul.f32.gmra.mxu0 %v1374
    %v1414 = vpop.f32.mrf.mxu0
    %v1415 = vadd.f32 0.0, %v1414
    %1416 = vmatmul.f32.gmra.mxu0 %v1377
    %v1417 = vpop.f32.mrf.mxu0
    %v1418 = vadd.f32 0.0, %v1417
    %1419 = vdwg.mxu0
    %s1420 = scalar_lea.vmem [#allocation2], 192
    %1421 = vst.msk [vmem:[%s1420] sm:$0xff] %vm31, %v1397
    %1422 = vst.msk [vmem:[%s1420 + $0x8] sm:$0xff] %vm31, %v1400
    %1423 = vst.msk [vmem:[%s1420 + $0x10] sm:$0xff] %vm31, %v1403
    %1424 = vst.msk [vmem:[%s1420 + $0x18] sm:$0xff] %vm31, %v1406
    %1425 = vst.msk [vmem:[%s1420 + $0x20] sm:$0xff] %vm31, %v1409
    %1426 = vst.msk [vmem:[%s1420 + $0x28] sm:$0xff] %vm31, %v1412
    %1427 = vst.msk [vmem:[%s1420 + $0x30] sm:$0xff] %vm31, %v1415
    %1428 = vst.msk [vmem:[%s1420 + $0x38] sm:$0xff] %vm31, %v1418
    %s1429 = scalar_lea.vmem %s0, 256
    %v1430 = vld [vmem:[%s1429] sm:$0xff]
    %v1431 = vld [vmem:[%s1429 + $0x8] sm:$0xff]
    %v1432 = vld [vmem:[%s1429 + $0x10] sm:$0xff]
    %v1433 = vld [vmem:[%s1429 + $0x18] sm:$0xff]
    %v1434 = vld [vmem:[%s1429 + $0x20] sm:$0xff]
    %v1435 = vld [vmem:[%s1429 + $0x28] sm:$0xff]
    %v1436 = vld [vmem:[%s1429 + $0x30] sm:$0xff]
    %v1437 = vld [vmem:[%s1429 + $0x38] sm:$0xff]
    %s1438 = scalar_lea.vmem %s1, 256
    %v1439 = vld [vmem:[%s1438] sm:$0xff]
    %v1440 = vld [vmem:[%s1438 + $0x8] sm:$0xff]
    %v1441 = vld [vmem:[%s1438 + $0x10] sm:$0xff]
    %v1442 = vld [vmem:[%s1438 + $0x18] sm:$0xff]
    %v1443 = vld [vmem:[%s1438 + $0x20] sm:$0xff]
    %v1444 = vld [vmem:[%s1438 + $0x28] sm:$0xff]
    %v1445 = vld [vmem:[%s1438 + $0x30] sm:$0xff]
    %v1446 = vld [vmem:[%s1438 + $0x38] sm:$0xff]
    %v1448 = vsel %vm31, %v1430, 0
    %v1451 = vsel %vm31, %v1431, 0
    %v1454 = vsel %vm31, %v1432, 0
    %v1457 = vsel %vm31, %v1433, 0
    %v1460 = vsel %vm31, %v1434, 0
    %v1463 = vsel %vm31, %v1435, 0
    %v1466 = vsel %vm31, %v1436, 0
    %v1469 = vsel %vm31, %v1437, 0
    %1471 = vmatpush.msra.mxu0 0.0
    %1472 = vmatpush.msra.mxu0 0.0
    %1473 = vmatpush.msra.mxu0 0.0
    %1474 = vmatpush.msra.mxu0 0.0
    %1475 = vmatpush.msra.mxu0 0.0
    %1476 = vmatpush.msra.mxu0 0.0
    %1477 = vmatpush.msra.mxu0 0.0
    %1478 = vmatpush.msra.mxu0 0.0
    %1479 = vmatpush.msra.mxu0 %v1446
    %1480 = vmatpush.msra.mxu0 %v1445
    %1481 = vmatpush.msra.mxu0 %v1444
    %1482 = vmatpush.msra.mxu0 %v1443
    %1483 = vmatpush.msra.mxu0 %v1442
    %1484 = vmatpush.msra.mxu0 %v1441
    %1485 = vmatpush.msra.mxu0 %v1440
    %1486 = vmatpush.msra.mxu0 %v1439
    %1487 = vmatmul.f32.gmra.mxu0 %v1448
    %v1488 = vpop.f32.mrf.mxu0
    %v1489 = vadd.f32 0.0, %v1488
    %1490 = vmatmul.f32.gmra.mxu0 %v1451
    %v1491 = vpop.f32.mrf.mxu0
    %v1492 = vadd.f32 0.0, %v1491
    %1493 = vmatmul.f32.gmra.mxu0 %v1454
    %v1494 = vpop.f32.mrf.mxu0
    %v1495 = vadd.f32 0.0, %v1494
    %1496 = vmatmul.f32.gmra.mxu0 %v1457
    %v1497 = vpop.f32.mrf.mxu0
    %v1498 = vadd.f32 0.0, %v1497
    %1499 = vmatmul.f32.gmra.mxu0 %v1460
    %v1500 = vpop.f32.mrf.mxu0
    %v1501 = vadd.f32 0.0, %v1500
    %1502 = vmatmul.f32.gmra.mxu0 %v1463
    %v1503 = vpop.f32.mrf.mxu0
    %v1504 = vadd.f32 0.0, %v1503
    %1505 = vmatmul.f32.gmra.mxu0 %v1466
    %v1506 = vpop.f32.mrf.mxu0
    %v1507 = vadd.f32 0.0, %v1506
    %1508 = vmatmul.f32.gmra.mxu0 %v1469
    %v1509 = vpop.f32.mrf.mxu0
    %v1510 = vadd.f32 0.0, %v1509
    %1511 = vdwg.mxu0
    %v1512 = vsel %vm97, %v1489, -inf
    %1513 = vmax.xlane.f32.xlu0 %v1512
    %v1514 = vpop.xlane.xlu0 %1513
    %v1515 = vsel %vm97, %v1492, -inf
    %1516 = vmax.xlane.f32.xlu0 %v1515
    %v1517 = vpop.xlane.xlu0 %1516
    %v1518 = vsel %vm97, %v1495, -inf
    %1519 = vmax.xlane.f32.xlu0 %v1518
    %v1520 = vpop.xlane.xlu0 %1519
    %v1521 = vsel %vm97, %v1498, -inf
    %1522 = vmax.xlane.f32.xlu0 %v1521
    %v1523 = vpop.xlane.xlu0 %1522
    %v1524 = vsel %vm97, %v1501, -inf
    %1525 = vmax.xlane.f32.xlu0 %v1524
    %v1526 = vpop.xlane.xlu0 %1525
    %v1527 = vsel %vm97, %v1504, -inf
    %1528 = vmax.xlane.f32.xlu0 %v1527
    %v1529 = vpop.xlane.xlu0 %1528
    %v1530 = vsel %vm97, %v1507, -inf
    %1531 = vmax.xlane.f32.xlu0 %v1530
    %v1532 = vpop.xlane.xlu0 %1531
    %v1533 = vsel %vm97, %v1510, -inf
    %1534 = vmax.xlane.f32.xlu0 %v1533
    %v1535 = vpop.xlane.xlu0 %1534
    %v1536 = vsub.f32 %v1489, %v1514
    %v1537 = vsub.f32 %v1492, %v1517
    %v1538 = vsub.f32 %v1495, %v1520
    %v1539 = vsub.f32 %v1498, %v1523
    %v1540 = vsub.f32 %v1501, %v1526
    %v1541 = vsub.f32 %v1504, %v1529
    %v1542 = vsub.f32 %v1507, %v1532
    %v1543 = vsub.f32 %v1510, %v1535
    %v1544 = vmul.f32 %v1536, 1.442695
    %v1545 = vpow.pop %v1544
    %v1546 = vmul.f32 %v1537, 1.442695
    %v1547 = vpow.pop %v1546
    %v1548 = vmul.f32 %v1538, 1.442695
    %v1549 = vpow.pop %v1548
    %v1550 = vmul.f32 %v1539, 1.442695
    %v1551 = vpow.pop %v1550
    %v1552 = vmul.f32 %v1540, 1.442695
    %v1553 = vpow.pop %v1552
    %v1554 = vmul.f32 %v1541, 1.442695
    %v1555 = vpow.pop %v1554
    %v1556 = vmul.f32 %v1542, 1.442695
    %v1557 = vpow.pop %v1556
    %v1558 = vmul.f32 %v1543, 1.442695
    %v1559 = vpow.pop %v1558
    %v1560 = vsel %vm97, %v1545, 0.0
    %1561 = vadd.xlane.f32.xlu0 %v1560
    %v1562 = vpop.xlane.xlu0 %1561
    %v1563 = vsel %vm97, %v1547, 0.0
    %1564 = vadd.xlane.f32.xlu0 %v1563
    %v1565 = vpop.xlane.xlu0 %1564
    %v1566 = vsel %vm97, %v1549, 0.0
    %1567 = vadd.xlane.f32.xlu0 %v1566
    %v1568 = vpop.xlane.xlu0 %1567
    %v1569 = vsel %vm97, %v1551, 0.0
    %1570 = vadd.xlane.f32.xlu0 %v1569
    %v1571 = vpop.xlane.xlu0 %1570
    %v1572 = vsel %vm97, %v1553, 0.0
    %1573 = vadd.xlane.f32.xlu0 %v1572
    %v1574 = vpop.xlane.xlu0 %1573
    %v1575 = vsel %vm97, %v1555, 0.0
    %1576 = vadd.xlane.f32.xlu0 %v1575
    %v1577 = vpop.xlane.xlu0 %1576
    %v1578 = vsel %vm97, %v1557, 0.0
    %1579 = vadd.xlane.f32.xlu0 %v1578
    %v1580 = vpop.xlane.xlu0 %1579
    %v1581 = vsel %vm97, %v1559, 0.0
    %1582 = vadd.xlane.f32.xlu0 %v1581
    %v1583 = vpop.xlane.xlu0 %1582
    %v1584 = vrcp.pop %v1562
    %v1585 = vmul.f32 %v1562, %v1584
    %v1586 = vsub.f32 1.0, %v1585
    %v1587 = vmul.f32 %v1584, %v1586
    %v1588 = vadd.f32 %v1584, %v1587
    %vm1589 = vweird.f32 %v1562
    %vm1590 = vweird.f32 %v1584
    %vm1591 = vmor %vm1589, %vm1590
    %v1592 = vsel %vm1591, %v1584, %v1588
    %v1593 = vand.u32 2147483647, %v1562
    %vm1594 = vcmp.eq.f32.partialorder %v1593, 8.507059e+37
    %v1595 = vand.u32 %v1562, 2147483648
    %v1596 = vor.u32 1.1754944e-38, %v1595
    %v1597 = vsel %vm1594, %v1596, %v1592
    %v1598 = vmul.f32 %v1545, %v1597
    %v1599 = vrcp.pop %v1565
    %v1600 = vmul.f32 %v1565, %v1599
    %v1601 = vsub.f32 1.0, %v1600
    %v1602 = vmul.f32 %v1599, %v1601
    %v1603 = vadd.f32 %v1599, %v1602
    %vm1604 = vweird.f32 %v1565
    %vm1605 = vweird.f32 %v1599
    %vm1606 = vmor %vm1604, %vm1605
    %v1607 = vsel %vm1606, %v1599, %v1603
    %v1608 = vand.u32 2147483647, %v1565
    %vm1609 = vcmp.eq.f32.partialorder %v1608, 8.507059e+37
    %v1610 = vand.u32 %v1565, 2147483648
    %v1611 = vor.u32 1.1754944e-38, %v1610
    %v1612 = vsel %vm1609, %v1611, %v1607
    %v1613 = vmul.f32 %v1547, %v1612
    %v1614 = vrcp.pop %v1568
    %v1615 = vmul.f32 %v1568, %v1614
    %v1616 = vsub.f32 1.0, %v1615
    %v1617 = vmul.f32 %v1614, %v1616
    %v1618 = vadd.f32 %v1614, %v1617
    %vm1619 = vweird.f32 %v1568
    %vm1620 = vweird.f32 %v1614
    %vm1621 = vmor %vm1619, %vm1620
    %v1622 = vsel %vm1621, %v1614, %v1618
    %v1623 = vand.u32 2147483647, %v1568
    %vm1624 = vcmp.eq.f32.partialorder %v1623, 8.507059e+37
    %v1625 = vand.u32 %v1568, 2147483648
    %v1626 = vor.u32 1.1754944e-38, %v1625
    %v1627 = vsel %vm1624, %v1626, %v1622
    %v1628 = vmul.f32 %v1549, %v1627
    %v1629 = vrcp.pop %v1571
    %v1630 = vmul.f32 %v1571, %v1629
    %v1631 = vsub.f32 1.0, %v1630
    %v1632 = vmul.f32 %v1629, %v1631
    %v1633 = vadd.f32 %v1629, %v1632
    %vm1634 = vweird.f32 %v1571
    %vm1635 = vweird.f32 %v1629
    %vm1636 = vmor %vm1634, %vm1635
    %v1637 = vsel %vm1636, %v1629, %v1633
    %v1638 = vand.u32 2147483647, %v1571
    %vm1639 = vcmp.eq.f32.partialorder %v1638, 8.507059e+37
    %v1640 = vand.u32 %v1571, 2147483648
    %v1641 = vor.u32 1.1754944e-38, %v1640
    %v1642 = vsel %vm1639, %v1641, %v1637
    %v1643 = vmul.f32 %v1551, %v1642
    %v1644 = vrcp.pop %v1574
    %v1645 = vmul.f32 %v1574, %v1644
    %v1646 = vsub.f32 1.0, %v1645
    %v1647 = vmul.f32 %v1644, %v1646
    %v1648 = vadd.f32 %v1644, %v1647
    %vm1649 = vweird.f32 %v1574
    %vm1650 = vweird.f32 %v1644
    %vm1651 = vmor %vm1649, %vm1650
    %v1652 = vsel %vm1651, %v1644, %v1648
    %v1653 = vand.u32 2147483647, %v1574
    %vm1654 = vcmp.eq.f32.partialorder %v1653, 8.507059e+37
    %v1655 = vand.u32 %v1574, 2147483648
    %v1656 = vor.u32 1.1754944e-38, %v1655
    %v1657 = vsel %vm1654, %v1656, %v1652
    %v1658 = vmul.f32 %v1553, %v1657
    %v1659 = vrcp.pop %v1577
    %v1660 = vmul.f32 %v1577, %v1659
    %v1661 = vsub.f32 1.0, %v1660
    %v1662 = vmul.f32 %v1659, %v1661
    %v1663 = vadd.f32 %v1659, %v1662
    %vm1664 = vweird.f32 %v1577
    %vm1665 = vweird.f32 %v1659
    %vm1666 = vmor %vm1664, %vm1665
    %v1667 = vsel %vm1666, %v1659, %v1663
    %v1668 = vand.u32 2147483647, %v1577
    %vm1669 = vcmp.eq.f32.partialorder %v1668, 8.507059e+37
    %v1670 = vand.u32 %v1577, 2147483648
    %v1671 = vor.u32 1.1754944e-38, %v1670
    %v1672 = vsel %vm1669, %v1671, %v1667
    %v1673 = vmul.f32 %v1555, %v1672
    %v1674 = vrcp.pop %v1580
    %v1675 = vmul.f32 %v1580, %v1674
    %v1676 = vsub.f32 1.0, %v1675
    %v1677 = vmul.f32 %v1674, %v1676
    %v1678 = vadd.f32 %v1674, %v1677
    %vm1679 = vweird.f32 %v1580
    %vm1680 = vweird.f32 %v1674
    %vm1681 = vmor %vm1679, %vm1680
    %v1682 = vsel %vm1681, %v1674, %v1678
    %v1683 = vand.u32 2147483647, %v1580
    %vm1684 = vcmp.eq.f32.partialorder %v1683, 8.507059e+37
    %v1685 = vand.u32 %v1580, 2147483648
    %v1686 = vor.u32 1.1754944e-38, %v1685
    %v1687 = vsel %vm1684, %v1686, %v1682
    %v1688 = vmul.f32 %v1557, %v1687
    %v1689 = vrcp.pop %v1583
    %v1690 = vmul.f32 %v1583, %v1689
    %v1691 = vsub.f32 1.0, %v1690
    %v1692 = vmul.f32 %v1689, %v1691
    %v1693 = vadd.f32 %v1689, %v1692
    %vm1694 = vweird.f32 %v1583
    %vm1695 = vweird.f32 %v1689
    %vm1696 = vmor %vm1694, %vm1695
    %v1697 = vsel %vm1696, %v1689, %v1693
    %v1698 = vand.u32 2147483647, %v1583
    %vm1699 = vcmp.eq.f32.partialorder %v1698, 8.507059e+37
    %v1700 = vand.u32 %v1583, 2147483648
    %v1701 = vor.u32 1.1754944e-38, %v1700
    %v1702 = vsel %vm1699, %v1701, %v1697
    %v1703 = vmul.f32 %v1559, %v1702
    %s1704 = scalar_lea.vmem %s2, 128
    %v1705 = vld [vmem:[%s1704] sm:$0xff]
    %v1706 = vld [vmem:[%s1704 + $0x8] sm:$0xff]
    %v1707 = vld [vmem:[%s1704 + $0x10] sm:$0xff]
    %v1708 = vld [vmem:[%s1704 + $0x18] sm:$0xff]
    %v1710 = vsel %vm97, %v1598, 0
    %v1713 = vsel %vm97, %v1613, 0
    %v1716 = vsel %vm97, %v1628, 0
    %v1719 = vsel %vm97, %v1643, 0
    %v1722 = vsel %vm97, %v1658, 0
    %v1725 = vsel %vm97, %v1673, 0
    %v1728 = vsel %vm97, %v1688, 0
    %v1731 = vsel %vm97, %v1703, 0
    %1733 = vmatpush.msra.mxu0 0.0
    %1734 = vmatpush.msra.mxu0 0.0
    %1735 = vmatpush.msra.mxu0 0.0
    %1736 = vmatpush.msra.mxu0 0.0
    %1737 = vmatpush.msra.mxu0 0.0
    %1738 = vmatpush.msra.mxu0 0.0
    %1739 = vmatpush.msra.mxu0 0.0
    %1740 = vmatpush.msra.mxu0 0.0
    %1741 = vmatpush.msra.mxu0 0.0
    %1742 = vmatpush.msra.mxu0 0.0
    %1743 = vmatpush.msra.mxu0 0.0
    %1744 = vmatpush.msra.mxu0 0.0
    %1745 = vmatpush.msra.mxu0 %v1708
    %1746 = vmatpush.msra.mxu0 %v1707
    %1747 = vmatpush.msra.mxu0 %v1706
    %1748 = vmatpush.msra.mxu0 %v1705
    %1749 = vmatmul.f32.gmra.mxu0 %v1710
    %v1750 = vpop.f32.mrf.mxu0
    %v1751 = vadd.f32 0.0, %v1750
    %1752 = vmatmul.f32.gmra.mxu0 %v1713
    %v1753 = vpop.f32.mrf.mxu0
    %v1754 = vadd.f32 0.0, %v1753
    %1755 = vmatmul.f32.gmra.mxu0 %v1716
    %v1756 = vpop.f32.mrf.mxu0
    %v1757 = vadd.f32 0.0, %v1756
    %1758 = vmatmul.f32.gmra.mxu0 %v1719
    %v1759 = vpop.f32.mrf.mxu0
    %v1760 = vadd.f32 0.0, %v1759
    %1761 = vmatmul.f32.gmra.mxu0 %v1722
    %v1762 = vpop.f32.mrf.mxu0
    %v1763 = vadd.f32 0.0, %v1762
    %1764 = vmatmul.f32.gmra.mxu0 %v1725
    %v1765 = vpop.f32.mrf.mxu0
    %v1766 = vadd.f32 0.0, %v1765
    %1767 = vmatmul.f32.gmra.mxu0 %v1728
    %v1768 = vpop.f32.mrf.mxu0
    %v1769 = vadd.f32 0.0, %v1768
    %1770 = vmatmul.f32.gmra.mxu0 %v1731
    %v1771 = vpop.f32.mrf.mxu0
    %v1772 = vadd.f32 0.0, %v1771
    %1773 = vdwg.mxu0
    %s1774 = scalar_lea.vmem [#allocation2], 256
    %1775 = vst.msk [vmem:[%s1774] sm:$0xff] %vm31, %v1751
    %1776 = vst.msk [vmem:[%s1774 + $0x8] sm:$0xff] %vm31, %v1754
    %1777 = vst.msk [vmem:[%s1774 + $0x10] sm:$0xff] %vm31, %v1757
    %1778 = vst.msk [vmem:[%s1774 + $0x18] sm:$0xff] %vm31, %v1760
    %1779 = vst.msk [vmem:[%s1774 + $0x20] sm:$0xff] %vm31, %v1763
    %1780 = vst.msk [vmem:[%s1774 + $0x28] sm:$0xff] %vm31, %v1766
    %1781 = vst.msk [vmem:[%s1774 + $0x30] sm:$0xff] %vm31, %v1769
    %1782 = vst.msk [vmem:[%s1774 + $0x38] sm:$0xff] %vm31, %v1772
    %s1783 = scalar_lea.vmem %s0, 320
    %v1784 = vld [vmem:[%s1783] sm:$0xff]
    %v1785 = vld [vmem:[%s1783 + $0x8] sm:$0xff]
    %v1786 = vld [vmem:[%s1783 + $0x10] sm:$0xff]
    %v1787 = vld [vmem:[%s1783 + $0x18] sm:$0xff]
    %v1788 = vld [vmem:[%s1783 + $0x20] sm:$0xff]
    %v1789 = vld [vmem:[%s1783 + $0x28] sm:$0xff]
    %v1790 = vld [vmem:[%s1783 + $0x30] sm:$0xff]
    %v1791 = vld [vmem:[%s1783 + $0x38] sm:$0xff]
    %s1792 = scalar_lea.vmem %s1, 320
    %v1793 = vld [vmem:[%s1792] sm:$0xff]
    %v1794 = vld [vmem:[%s1792 + $0x8] sm:$0xff]
    %v1795 = vld [vmem:[%s1792 + $0x10] sm:$0xff]
    %v1796 = vld [vmem:[%s1792 + $0x18] sm:$0xff]
    %v1797 = vld [vmem:[%s1792 + $0x20] sm:$0xff]
    %v1798 = vld [vmem:[%s1792 + $0x28] sm:$0xff]
    %v1799 = vld [vmem:[%s1792 + $0x30] sm:$0xff]
    %v1800 = vld [vmem:[%s1792 + $0x38] sm:$0xff]
    %v1802 = vsel %vm31, %v1784, 0
    %v1805 = vsel %vm31, %v1785, 0
    %v1808 = vsel %vm31, %v1786, 0
    %v1811 = vsel %vm31, %v1787, 0
    %v1814 = vsel %vm31, %v1788, 0
    %v1817 = vsel %vm31, %v1789, 0
    %v1820 = vsel %vm31, %v1790, 0
    %v1823 = vsel %vm31, %v1791, 0
    %1825 = vmatpush.msra.mxu0 0.0
    %1826 = vmatpush.msra.mxu0 0.0
    %1827 = vmatpush.msra.mxu0 0.0
    %1828 = vmatpush.msra.mxu0 0.0
    %1829 = vmatpush.msra.mxu0 0.0
    %1830 = vmatpush.msra.mxu0 0.0
    %1831 = vmatpush.msra.mxu0 0.0
    %1832 = vmatpush.msra.mxu0 0.0
    %1833 = vmatpush.msra.mxu0 %v1800
    %1834 = vmatpush.msra.mxu0 %v1799
    %1835 = vmatpush.msra.mxu0 %v1798
    %1836 = vmatpush.msra.mxu0 %v1797
    %1837 = vmatpush.msra.mxu0 %v1796
    %1838 = vmatpush.msra.mxu0 %v1795
    %1839 = vmatpush.msra.mxu0 %v1794
    %1840 = vmatpush.msra.mxu0 %v1793
    %1841 = vmatmul.f32.gmra.mxu0 %v1802
    %v1842 = vpop.f32.mrf.mxu0
    %v1843 = vadd.f32 0.0, %v1842
    %1844 = vmatmul.f32.gmra.mxu0 %v1805
    %v1845 = vpop.f32.mrf.mxu0
    %v1846 = vadd.f32 0.0, %v1845
    %1847 = vmatmul.f32.gmra.mxu0 %v1808
    %v1848 = vpop.f32.mrf.mxu0
    %v1849 = vadd.f32 0.0, %v1848
    %1850 = vmatmul.f32.gmra.mxu0 %v1811
    %v1851 = vpop.f32.mrf.mxu0
    %v1852 = vadd.f32 0.0, %v1851
    %1853 = vmatmul.f32.gmra.mxu0 %v1814
    %v1854 = vpop.f32.mrf.mxu0
    %v1855 = vadd.f32 0.0, %v1854
    %1856 = vmatmul.f32.gmra.mxu0 %v1817
    %v1857 = vpop.f32.mrf.mxu0
    %v1858 = vadd.f32 0.0, %v1857
    %1859 = vmatmul.f32.gmra.mxu0 %v1820
    %v1860 = vpop.f32.mrf.mxu0
    %v1861 = vadd.f32 0.0, %v1860
    %1862 = vmatmul.f32.gmra.mxu0 %v1823
    %v1863 = vpop.f32.mrf.mxu0
    %v1864 = vadd.f32 0.0, %v1863
    %1865 = vdwg.mxu0
    %v1866 = vsel %vm97, %v1843, -inf
    %1867 = vmax.xlane.f32.xlu0 %v1866
    %v1868 = vpop.xlane.xlu0 %1867
    %v1869 = vsel %vm97, %v1846, -inf
    %1870 = vmax.xlane.f32.xlu0 %v1869
    %v1871 = vpop.xlane.xlu0 %1870
    %v1872 = vsel %vm97, %v1849, -inf
    %1873 = vmax.xlane.f32.xlu0 %v1872
    %v1874 = vpop.xlane.xlu0 %1873
    %v1875 = vsel %vm97, %v1852, -inf
    %1876 = vmax.xlane.f32.xlu0 %v1875
    %v1877 = vpop.xlane.xlu0 %1876
    %v1878 = vsel %vm97, %v1855, -inf
    %1879 = vmax.xlane.f32.xlu0 %v1878
    %v1880 = vpop.xlane.xlu0 %1879
    %v1881 = vsel %vm97, %v1858, -inf
    %1882 = vmax.xlane.f32.xlu0 %v1881
    %v1883 = vpop.xlane.xlu0 %1882
    %v1884 = vsel %vm97, %v1861, -inf
    %1885 = vmax.xlane.f32.xlu0 %v1884
    %v1886 = vpop.xlane.xlu0 %1885
    %v1887 = vsel %vm97, %v1864, -inf
    %1888 = vmax.xlane.f32.xlu0 %v1887
    %v1889 = vpop.xlane.xlu0 %1888
    %v1890 = vsub.f32 %v1843, %v1868
    %v1891 = vsub.f32 %v1846, %v1871
    %v1892 = vsub.f32 %v1849, %v1874
    %v1893 = vsub.f32 %v1852, %v1877
    %v1894 = vsub.f32 %v1855, %v1880
    %v1895 = vsub.f32 %v1858, %v1883
    %v1896 = vsub.f32 %v1861, %v1886
    %v1897 = vsub.f32 %v1864, %v1889
    %v1898 = vmul.f32 %v1890, 1.442695
    %v1899 = vpow.pop %v1898
    %v1900 = vmul.f32 %v1891, 1.442695
    %v1901 = vpow.pop %v1900
    %v1902 = vmul.f32 %v1892, 1.442695
    %v1903 = vpow.pop %v1902
    %v1904 = vmul.f32 %v1893, 1.442695
    %v1905 = vpow.pop %v1904
    %v1906 = vmul.f32 %v1894, 1.442695
    %v1907 = vpow.pop %v1906
    %v1908 = vmul.f32 %v1895, 1.442695
    %v1909 = vpow.pop %v1908
    %v1910 = vmul.f32 %v1896, 1.442695
    %v1911 = vpow.pop %v1910
    %v1912 = vmul.f32 %v1897, 1.442695
    %v1913 = vpow.pop %v1912
    %v1914 = vsel %vm97, %v1899, 0.0
    %1915 = vadd.xlane.f32.xlu0 %v1914
    %v1916 = vpop.xlane.xlu0 %1915
    %v1917 = vsel %vm97, %v1901, 0.0
    %1918 = vadd.xlane.f32.xlu0 %v1917
    %v1919 = vpop.xlane.xlu0 %1918
    %v1920 = vsel %vm97, %v1903, 0.0
    %1921 = vadd.xlane.f32.xlu0 %v1920
    %v1922 = vpop.xlane.xlu0 %1921
    %v1923 = vsel %vm97, %v1905, 0.0
    %1924 = vadd.xlane.f32.xlu0 %v1923
    %v1925 = vpop.xlane.xlu0 %1924
    %v1926 = vsel %vm97, %v1907, 0.0
    %1927 = vadd.xlane.f32.xlu0 %v1926
    %v1928 = vpop.xlane.xlu0 %1927
    %v1929 = vsel %vm97, %v1909, 0.0
    %1930 = vadd.xlane.f32.xlu0 %v1929
    %v1931 = vpop.xlane.xlu0 %1930
    %v1932 = vsel %vm97, %v1911, 0.0
    %1933 = vadd.xlane.f32.xlu0 %v1932
    %v1934 = vpop.xlane.xlu0 %1933
    %v1935 = vsel %vm97, %v1913, 0.0
    %1936 = vadd.xlane.f32.xlu0 %v1935
    %v1937 = vpop.xlane.xlu0 %1936
    %v1938 = vrcp.pop %v1916
    %v1939 = vmul.f32 %v1916, %v1938
    %v1940 = vsub.f32 1.0, %v1939
    %v1941 = vmul.f32 %v1938, %v1940
    %v1942 = vadd.f32 %v1938, %v1941
    %vm1943 = vweird.f32 %v1916
    %vm1944 = vweird.f32 %v1938
    %vm1945 = vmor %vm1943, %vm1944
    %v1946 = vsel %vm1945, %v1938, %v1942
    %v1947 = vand.u32 2147483647, %v1916
    %vm1948 = vcmp.eq.f32.partialorder %v1947, 8.507059e+37
    %v1949 = vand.u32 %v1916, 2147483648
    %v1950 = vor.u32 1.1754944e-38, %v1949
    %v1951 = vsel %vm1948, %v1950, %v1946
    %v1952 = vmul.f32 %v1899, %v1951
    %v1953 = vrcp.pop %v1919
    %v1954 = vmul.f32 %v1919, %v1953
    %v1955 = vsub.f32 1.0, %v1954
    %v1956 = vmul.f32 %v1953, %v1955
    %v1957 = vadd.f32 %v1953, %v1956
    %vm1958 = vweird.f32 %v1919
    %vm1959 = vweird.f32 %v1953
    %vm1960 = vmor %vm1958, %vm1959
    %v1961 = vsel %vm1960, %v1953, %v1957
    %v1962 = vand.u32 2147483647, %v1919
    %vm1963 = vcmp.eq.f32.partialorder %v1962, 8.507059e+37
    %v1964 = vand.u32 %v1919, 2147483648
    %v1965 = vor.u32 1.1754944e-38, %v1964
    %v1966 = vsel %vm1963, %v1965, %v1961
    %v1967 = vmul.f32 %v1901, %v1966
    %v1968 = vrcp.pop %v1922
    %v1969 = vmul.f32 %v1922, %v1968
    %v1970 = vsub.f32 1.0, %v1969
    %v1971 = vmul.f32 %v1968, %v1970
    %v1972 = vadd.f32 %v1968, %v1971
    %vm1973 = vweird.f32 %v1922
    %vm1974 = vweird.f32 %v1968
    %vm1975 = vmor %vm1973, %vm1974
    %v1976 = vsel %vm1975, %v1968, %v1972
    %v1977 = vand.u32 2147483647, %v1922
    %vm1978 = vcmp.eq.f32.partialorder %v1977, 8.507059e+37
    %v1979 = vand.u32 %v1922, 2147483648
    %v1980 = vor.u32 1.1754944e-38, %v1979
    %v1981 = vsel %vm1978, %v1980, %v1976
    %v1982 = vmul.f32 %v1903, %v1981
    %v1983 = vrcp.pop %v1925
    %v1984 = vmul.f32 %v1925, %v1983
    %v1985 = vsub.f32 1.0, %v1984
    %v1986 = vmul.f32 %v1983, %v1985
    %v1987 = vadd.f32 %v1983, %v1986
    %vm1988 = vweird.f32 %v1925
    %vm1989 = vweird.f32 %v1983
    %vm1990 = vmor %vm1988, %vm1989
    %v1991 = vsel %vm1990, %v1983, %v1987
    %v1992 = vand.u32 2147483647, %v1925
    %vm1993 = vcmp.eq.f32.partialorder %v1992, 8.507059e+37
    %v1994 = vand.u32 %v1925, 2147483648
    %v1995 = vor.u32 1.1754944e-38, %v1994
    %v1996 = vsel %vm1993, %v1995, %v1991
    %v1997 = vmul.f32 %v1905, %v1996
    %v1998 = vrcp.pop %v1928
    %v1999 = vmul.f32 %v1928, %v1998
    %v2000 = vsub.f32 1.0, %v1999
    %v2001 = vmul.f32 %v1998, %v2000
    %v2002 = vadd.f32 %v1998, %v2001
    %vm2003 = vweird.f32 %v1928
    %vm2004 = vweird.f32 %v1998
    %vm2005 = vmor %vm2003, %vm2004
    %v2006 = vsel %vm2005, %v1998, %v2002
    %v2007 = vand.u32 2147483647, %v1928
    %vm2008 = vcmp.eq.f32.partialorder %v2007, 8.507059e+37
    %v2009 = vand.u32 %v1928, 2147483648
    %v2010 = vor.u32 1.1754944e-38, %v2009
    %v2011 = vsel %vm2008, %v2010, %v2006
    %v2012 = vmul.f32 %v1907, %v2011
    %v2013 = vrcp.pop %v1931
    %v2014 = vmul.f32 %v1931, %v2013
    %v2015 = vsub.f32 1.0, %v2014
    %v2016 = vmul.f32 %v2013, %v2015
    %v2017 = vadd.f32 %v2013, %v2016
    %vm2018 = vweird.f32 %v1931
    %vm2019 = vweird.f32 %v2013
    %vm2020 = vmor %vm2018, %vm2019
    %v2021 = vsel %vm2020, %v2013, %v2017
    %v2022 = vand.u32 2147483647, %v1931
    %vm2023 = vcmp.eq.f32.partialorder %v2022, 8.507059e+37
    %v2024 = vand.u32 %v1931, 2147483648
    %v2025 = vor.u32 1.1754944e-38, %v2024
    %v2026 = vsel %vm2023, %v2025, %v2021
    %v2027 = vmul.f32 %v1909, %v2026
    %v2028 = vrcp.pop %v1934
    %v2029 = vmul.f32 %v1934, %v2028
    %v2030 = vsub.f32 1.0, %v2029
    %v2031 = vmul.f32 %v2028, %v2030
    %v2032 = vadd.f32 %v2028, %v2031
    %vm2033 = vweird.f32 %v1934
    %vm2034 = vweird.f32 %v2028
    %vm2035 = vmor %vm2033, %vm2034
    %v2036 = vsel %vm2035, %v2028, %v2032
    %v2037 = vand.u32 2147483647, %v1934
    %vm2038 = vcmp.eq.f32.partialorder %v2037, 8.507059e+37
    %v2039 = vand.u32 %v1934, 2147483648
    %v2040 = vor.u32 1.1754944e-38, %v2039
    %v2041 = vsel %vm2038, %v2040, %v2036
    %v2042 = vmul.f32 %v1911, %v2041
    %v2043 = vrcp.pop %v1937
    %v2044 = vmul.f32 %v1937, %v2043
    %v2045 = vsub.f32 1.0, %v2044
    %v2046 = vmul.f32 %v2043, %v2045
    %v2047 = vadd.f32 %v2043, %v2046
    %vm2048 = vweird.f32 %v1937
    %vm2049 = vweird.f32 %v2043
    %vm2050 = vmor %vm2048, %vm2049
    %v2051 = vsel %vm2050, %v2043, %v2047
    %v2052 = vand.u32 2147483647, %v1937
    %vm2053 = vcmp.eq.f32.partialorder %v2052, 8.507059e+37
    %v2054 = vand.u32 %v1937, 2147483648
    %v2055 = vor.u32 1.1754944e-38, %v2054
    %v2056 = vsel %vm2053, %v2055, %v2051
    %v2057 = vmul.f32 %v1913, %v2056
    %s2058 = scalar_lea.vmem %s2, 160
    %v2059 = vld [vmem:[%s2058] sm:$0xff]
    %v2060 = vld [vmem:[%s2058 + $0x8] sm:$0xff]
    %v2061 = vld [vmem:[%s2058 + $0x10] sm:$0xff]
    %v2062 = vld [vmem:[%s2058 + $0x18] sm:$0xff]
    %v2064 = vsel %vm97, %v1952, 0
    %v2067 = vsel %vm97, %v1967, 0
    %v2070 = vsel %vm97, %v1982, 0
    %v2073 = vsel %vm97, %v1997, 0
    %v2076 = vsel %vm97, %v2012, 0
    %v2079 = vsel %vm97, %v2027, 0
    %v2082 = vsel %vm97, %v2042, 0
    %v2085 = vsel %vm97, %v2057, 0
    %2087 = vmatpush.msra.mxu0 0.0
    %2088 = vmatpush.msra.mxu0 0.0
    %2089 = vmatpush.msra.mxu0 0.0
    %2090 = vmatpush.msra.mxu0 0.0
    %2091 = vmatpush.msra.mxu0 0.0
    %2092 = vmatpush.msra.mxu0 0.0
    %2093 = vmatpush.msra.mxu0 0.0
    %2094 = vmatpush.msra.mxu0 0.0
    %2095 = vmatpush.msra.mxu0 0.0
    %2096 = vmatpush.msra.mxu0 0.0
    %2097 = vmatpush.msra.mxu0 0.0
    %2098 = vmatpush.msra.mxu0 0.0
    %2099 = vmatpush.msra.mxu0 %v2062
    %2100 = vmatpush.msra.mxu0 %v2061
    %2101 = vmatpush.msra.mxu0 %v2060
    %2102 = vmatpush.msra.mxu0 %v2059
    %2103 = vmatmul.f32.gmra.mxu0 %v2064
    %v2104 = vpop.f32.mrf.mxu0
    %v2105 = vadd.f32 0.0, %v2104
    %2106 = vmatmul.f32.gmra.mxu0 %v2067
    %v2107 = vpop.f32.mrf.mxu0
    %v2108 = vadd.f32 0.0, %v2107
    %2109 = vmatmul.f32.gmra.mxu0 %v2070
    %v2110 = vpop.f32.mrf.mxu0
    %v2111 = vadd.f32 0.0, %v2110
    %2112 = vmatmul.f32.gmra.mxu0 %v2073
    %v2113 = vpop.f32.mrf.mxu0
    %v2114 = vadd.f32 0.0, %v2113
    %2115 = vmatmul.f32.gmra.mxu0 %v2076
    %v2116 = vpop.f32.mrf.mxu0
    %v2117 = vadd.f32 0.0, %v2116
    %2118 = vmatmul.f32.gmra.mxu0 %v2079
    %v2119 = vpop.f32.mrf.mxu0
    %v2120 = vadd.f32 0.0, %v2119
    %2121 = vmatmul.f32.gmra.mxu0 %v2082
    %v2122 = vpop.f32.mrf.mxu0
    %v2123 = vadd.f32 0.0, %v2122
    %2124 = vmatmul.f32.gmra.mxu0 %v2085
    %v2125 = vpop.f32.mrf.mxu0
    %v2126 = vadd.f32 0.0, %v2125
    %2127 = vdwg.mxu0
    %s2128 = scalar_lea.vmem [#allocation2], 320
    %2129 = vst.msk [vmem:[%s2128] sm:$0xff] %vm31, %v2105
    %2130 = vst.msk [vmem:[%s2128 + $0x8] sm:$0xff] %vm31, %v2108
    %2131 = vst.msk [vmem:[%s2128 + $0x10] sm:$0xff] %vm31, %v2111
    %2132 = vst.msk [vmem:[%s2128 + $0x18] sm:$0xff] %vm31, %v2114
    %2133 = vst.msk [vmem:[%s2128 + $0x20] sm:$0xff] %vm31, %v2117
    %2134 = vst.msk [vmem:[%s2128 + $0x28] sm:$0xff] %vm31, %v2120
    %2135 = vst.msk [vmem:[%s2128 + $0x30] sm:$0xff] %vm31, %v2123
    %2136 = vst.msk [vmem:[%s2128 + $0x38] sm:$0xff] %vm31, %v2126
    %s2137 = scalar_lea.vmem %s0, 384
    %v2138 = vld [vmem:[%s2137] sm:$0xff]
    %v2139 = vld [vmem:[%s2137 + $0x8] sm:$0xff]
    %v2140 = vld [vmem:[%s2137 + $0x10] sm:$0xff]
    %v2141 = vld [vmem:[%s2137 + $0x18] sm:$0xff]
    %v2142 = vld [vmem:[%s2137 + $0x20] sm:$0xff]
    %v2143 = vld [vmem:[%s2137 + $0x28] sm:$0xff]
    %v2144 = vld [vmem:[%s2137 + $0x30] sm:$0xff]
    %v2145 = vld [vmem:[%s2137 + $0x38] sm:$0xff]
    %s2146 = scalar_lea.vmem %s1, 384
    %v2147 = vld [vmem:[%s2146] sm:$0xff]
    %v2148 = vld [vmem:[%s2146 + $0x8] sm:$0xff]
    %v2149 = vld [vmem:[%s2146 + $0x10] sm:$0xff]
    %v2150 = vld [vmem:[%s2146 + $0x18] sm:$0xff]
    %v2151 = vld [vmem:[%s2146 + $0x20] sm:$0xff]
    %v2152 = vld [vmem:[%s2146 + $0x28] sm:$0xff]
    %v2153 = vld [vmem:[%s2146 + $0x30] sm:$0xff]
    %v2154 = vld [vmem:[%s2146 + $0x38] sm:$0xff]
    %v2156 = vsel %vm31, %v2138, 0
    %v2159 = vsel %vm31, %v2139, 0
    %v2162 = vsel %vm31, %v2140, 0
    %v2165 = vsel %vm31, %v2141, 0
    %v2168 = vsel %vm31, %v2142, 0
    %v2171 = vsel %vm31, %v2143, 0
    %v2174 = vsel %vm31, %v2144, 0
    %v2177 = vsel %vm31, %v2145, 0
    %2179 = vmatpush.msra.mxu0 0.0
    %2180 = vmatpush.msra.mxu0 0.0
    %2181 = vmatpush.msra.mxu0 0.0
    %2182 = vmatpush.msra.mxu0 0.0
    %2183 = vmatpush.msra.mxu0 0.0
    %2184 = vmatpush.msra.mxu0 0.0
    %2185 = vmatpush.msra.mxu0 0.0
    %2186 = vmatpush.msra.mxu0 0.0
    %2187 = vmatpush.msra.mxu0 %v2154
    %2188 = vmatpush.msra.mxu0 %v2153
    %2189 = vmatpush.msra.mxu0 %v2152
    %2190 = vmatpush.msra.mxu0 %v2151
    %2191 = vmatpush.msra.mxu0 %v2150
    %2192 = vmatpush.msra.mxu0 %v2149
    %2193 = vmatpush.msra.mxu0 %v2148
    %2194 = vmatpush.msra.mxu0 %v2147
    %2195 = vmatmul.f32.gmra.mxu0 %v2156
    %v2196 = vpop.f32.mrf.mxu0
    %v2197 = vadd.f32 0.0, %v2196
    %2198 = vmatmul.f32.gmra.mxu0 %v2159
    %v2199 = vpop.f32.mrf.mxu0
    %v2200 = vadd.f32 0.0, %v2199
    %2201 = vmatmul.f32.gmra.mxu0 %v2162
    %v2202 = vpop.f32.mrf.mxu0
    %v2203 = vadd.f32 0.0, %v2202
    %2204 = vmatmul.f32.gmra.mxu0 %v2165
    %v2205 = vpop.f32.mrf.mxu0
    %v2206 = vadd.f32 0.0, %v2205
    %2207 = vmatmul.f32.gmra.mxu0 %v2168
    %v2208 = vpop.f32.mrf.mxu0
    %v2209 = vadd.f32 0.0, %v2208
    %2210 = vmatmul.f32.gmra.mxu0 %v2171
    %v2211 = vpop.f32.mrf.mxu0
    %v2212 = vadd.f32 0.0, %v2211
    %2213 = vmatmul.f32.gmra.mxu0 %v2174
    %v2214 = vpop.f32.mrf.mxu0
    %v2215 = vadd.f32 0.0, %v2214
    %2216 = vmatmul.f32.gmra.mxu0 %v2177
    %v2217 = vpop.f32.mrf.mxu0
    %v2218 = vadd.f32 0.0, %v2217
    %2219 = vdwg.mxu0
    %v2220 = vsel %vm97, %v2197, -inf
    %2221 = vmax.xlane.f32.xlu0 %v2220
    %v2222 = vpop.xlane.xlu0 %2221
    %v2223 = vsel %vm97, %v2200, -inf
    %2224 = vmax.xlane.f32.xlu0 %v2223
    %v2225 = vpop.xlane.xlu0 %2224
    %v2226 = vsel %vm97, %v2203, -inf
    %2227 = vmax.xlane.f32.xlu0 %v2226
    %v2228 = vpop.xlane.xlu0 %2227
    %v2229 = vsel %vm97, %v2206, -inf
    %2230 = vmax.xlane.f32.xlu0 %v2229
    %v2231 = vpop.xlane.xlu0 %2230
    %v2232 = vsel %vm97, %v2209, -inf
    %2233 = vmax.xlane.f32.xlu0 %v2232
    %v2234 = vpop.xlane.xlu0 %2233
    %v2235 = vsel %vm97, %v2212, -inf
    %2236 = vmax.xlane.f32.xlu0 %v2235
    %v2237 = vpop.xlane.xlu0 %2236
    %v2238 = vsel %vm97, %v2215, -inf
    %2239 = vmax.xlane.f32.xlu0 %v2238
    %v2240 = vpop.xlane.xlu0 %2239
    %v2241 = vsel %vm97, %v2218, -inf
    %2242 = vmax.xlane.f32.xlu0 %v2241
    %v2243 = vpop.xlane.xlu0 %2242
    %v2244 = vsub.f32 %v2197, %v2222
    %v2245 = vsub.f32 %v2200, %v2225
    %v2246 = vsub.f32 %v2203, %v2228
    %v2247 = vsub.f32 %v2206, %v2231
    %v2248 = vsub.f32 %v2209, %v2234
    %v2249 = vsub.f32 %v2212, %v2237
    %v2250 = vsub.f32 %v2215, %v2240
    %v2251 = vsub.f32 %v2218, %v2243
    %v2252 = vmul.f32 %v2244, 1.442695
    %v2253 = vpow.pop %v2252
    %v2254 = vmul.f32 %v2245, 1.442695
    %v2255 = vpow.pop %v2254
    %v2256 = vmul.f32 %v2246, 1.442695
    %v2257 = vpow.pop %v2256
    %v2258 = vmul.f32 %v2247, 1.442695
    %v2259 = vpow.pop %v2258
    %v2260 = vmul.f32 %v2248, 1.442695
    %v2261 = vpow.pop %v2260
    %v2262 = vmul.f32 %v2249, 1.442695
    %v2263 = vpow.pop %v2262
    %v2264 = vmul.f32 %v2250, 1.442695
    %v2265 = vpow.pop %v2264
    %v2266 = vmul.f32 %v2251, 1.442695
    %v2267 = vpow.pop %v2266
    %v2268 = vsel %vm97, %v2253, 0.0
    %2269 = vadd.xlane.f32.xlu0 %v2268
    %v2270 = vpop.xlane.xlu0 %2269
    %v2271 = vsel %vm97, %v2255, 0.0
    %2272 = vadd.xlane.f32.xlu0 %v2271
    %v2273 = vpop.xlane.xlu0 %2272
    %v2274 = vsel %vm97, %v2257, 0.0
    %2275 = vadd.xlane.f32.xlu0 %v2274
    %v2276 = vpop.xlane.xlu0 %2275
    %v2277 = vsel %vm97, %v2259, 0.0
    %2278 = vadd.xlane.f32.xlu0 %v2277
    %v2279 = vpop.xlane.xlu0 %2278
    %v2280 = vsel %vm97, %v2261, 0.0
    %2281 = vadd.xlane.f32.xlu0 %v2280
    %v2282 = vpop.xlane.xlu0 %2281
    %v2283 = vsel %vm97, %v2263, 0.0
    %2284 = vadd.xlane.f32.xlu0 %v2283
    %v2285 = vpop.xlane.xlu0 %2284
    %v2286 = vsel %vm97, %v2265, 0.0
    %2287 = vadd.xlane.f32.xlu0 %v2286
    %v2288 = vpop.xlane.xlu0 %2287
    %v2289 = vsel %vm97, %v2267, 0.0
    %2290 = vadd.xlane.f32.xlu0 %v2289
    %v2291 = vpop.xlane.xlu0 %2290
    %v2292 = vrcp.pop %v2270
    %v2293 = vmul.f32 %v2270, %v2292
    %v2294 = vsub.f32 1.0, %v2293
    %v2295 = vmul.f32 %v2292, %v2294
    %v2296 = vadd.f32 %v2292, %v2295
    %vm2297 = vweird.f32 %v2270
    %vm2298 = vweird.f32 %v2292
    %vm2299 = vmor %vm2297, %vm2298
    %v2300 = vsel %vm2299, %v2292, %v2296
    %v2301 = vand.u32 2147483647, %v2270
    %vm2302 = vcmp.eq.f32.partialorder %v2301, 8.507059e+37
    %v2303 = vand.u32 %v2270, 2147483648
    %v2304 = vor.u32 1.1754944e-38, %v2303
    %v2305 = vsel %vm2302, %v2304, %v2300
    %v2306 = vmul.f32 %v2253, %v2305
    %v2307 = vrcp.pop %v2273
    %v2308 = vmul.f32 %v2273, %v2307
    %v2309 = vsub.f32 1.0, %v2308
    %v2310 = vmul.f32 %v2307, %v2309
    %v2311 = vadd.f32 %v2307, %v2310
    %vm2312 = vweird.f32 %v2273
    %vm2313 = vweird.f32 %v2307
    %vm2314 = vmor %vm2312, %vm2313
    %v2315 = vsel %vm2314, %v2307, %v2311
    %v2316 = vand.u32 2147483647, %v2273
    %vm2317 = vcmp.eq.f32.partialorder %v2316, 8.507059e+37
    %v2318 = vand.u32 %v2273, 2147483648
    %v2319 = vor.u32 1.1754944e-38, %v2318
    %v2320 = vsel %vm2317, %v2319, %v2315
    %v2321 = vmul.f32 %v2255, %v2320
    %v2322 = vrcp.pop %v2276
    %v2323 = vmul.f32 %v2276, %v2322
    %v2324 = vsub.f32 1.0, %v2323
    %v2325 = vmul.f32 %v2322, %v2324
    %v2326 = vadd.f32 %v2322, %v2325
    %vm2327 = vweird.f32 %v2276
    %vm2328 = vweird.f32 %v2322
    %vm2329 = vmor %vm2327, %vm2328
    %v2330 = vsel %vm2329, %v2322, %v2326
    %v2331 = vand.u32 2147483647, %v2276
    %vm2332 = vcmp.eq.f32.partialorder %v2331, 8.507059e+37
    %v2333 = vand.u32 %v2276, 2147483648
    %v2334 = vor.u32 1.1754944e-38, %v2333
    %v2335 = vsel %vm2332, %v2334, %v2330
    %v2336 = vmul.f32 %v2257, %v2335
    %v2337 = vrcp.pop %v2279
    %v2338 = vmul.f32 %v2279, %v2337
    %v2339 = vsub.f32 1.0, %v2338
    %v2340 = vmul.f32 %v2337, %v2339
    %v2341 = vadd.f32 %v2337, %v2340
    %vm2342 = vweird.f32 %v2279
    %vm2343 = vweird.f32 %v2337
    %vm2344 = vmor %vm2342, %vm2343
    %v2345 = vsel %vm2344, %v2337, %v2341
    %v2346 = vand.u32 2147483647, %v2279
    %vm2347 = vcmp.eq.f32.partialorder %v2346, 8.507059e+37
    %v2348 = vand.u32 %v2279, 2147483648
    %v2349 = vor.u32 1.1754944e-38, %v2348
    %v2350 = vsel %vm2347, %v2349, %v2345
    %v2351 = vmul.f32 %v2259, %v2350
    %v2352 = vrcp.pop %v2282
    %v2353 = vmul.f32 %v2282, %v2352
    %v2354 = vsub.f32 1.0, %v2353
    %v2355 = vmul.f32 %v2352, %v2354
    %v2356 = vadd.f32 %v2352, %v2355
    %vm2357 = vweird.f32 %v2282
    %vm2358 = vweird.f32 %v2352
    %vm2359 = vmor %vm2357, %vm2358
    %v2360 = vsel %vm2359, %v2352, %v2356
    %v2361 = vand.u32 2147483647, %v2282
    %vm2362 = vcmp.eq.f32.partialorder %v2361, 8.507059e+37
    %v2363 = vand.u32 %v2282, 2147483648
    %v2364 = vor.u32 1.1754944e-38, %v2363
    %v2365 = vsel %vm2362, %v2364, %v2360
    %v2366 = vmul.f32 %v2261, %v2365
    %v2367 = vrcp.pop %v2285
    %v2368 = vmul.f32 %v2285, %v2367
    %v2369 = vsub.f32 1.0, %v2368
    %v2370 = vmul.f32 %v2367, %v2369
    %v2371 = vadd.f32 %v2367, %v2370
    %vm2372 = vweird.f32 %v2285
    %vm2373 = vweird.f32 %v2367
    %vm2374 = vmor %vm2372, %vm2373
    %v2375 = vsel %vm2374, %v2367, %v2371
    %v2376 = vand.u32 2147483647, %v2285
    %vm2377 = vcmp.eq.f32.partialorder %v2376, 8.507059e+37
    %v2378 = vand.u32 %v2285, 2147483648
    %v2379 = vor.u32 1.1754944e-38, %v2378
    %v2380 = vsel %vm2377, %v2379, %v2375
    %v2381 = vmul.f32 %v2263, %v2380
    %v2382 = vrcp.pop %v2288
    %v2383 = vmul.f32 %v2288, %v2382
    %v2384 = vsub.f32 1.0, %v2383
    %v2385 = vmul.f32 %v2382, %v2384
    %v2386 = vadd.f32 %v2382, %v2385
    %vm2387 = vweird.f32 %v2288
    %vm2388 = vweird.f32 %v2382
    %vm2389 = vmor %vm2387, %vm2388
    %v2390 = vsel %vm2389, %v2382, %v2386
    %v2391 = vand.u32 2147483647, %v2288
    %vm2392 = vcmp.eq.f32.partialorder %v2391, 8.507059e+37
    %v2393 = vand.u32 %v2288, 2147483648
    %v2394 = vor.u32 1.1754944e-38, %v2393
    %v2395 = vsel %vm2392, %v2394, %v2390
    %v2396 = vmul.f32 %v2265, %v2395
    %v2397 = vrcp.pop %v2291
    %v2398 = vmul.f32 %v2291, %v2397
    %v2399 = vsub.f32 1.0, %v2398
    %v2400 = vmul.f32 %v2397, %v2399
    %v2401 = vadd.f32 %v2397, %v2400
    %vm2402 = vweird.f32 %v2291
    %vm2403 = vweird.f32 %v2397
    %vm2404 = vmor %vm2402, %vm2403
    %v2405 = vsel %vm2404, %v2397, %v2401
    %v2406 = vand.u32 2147483647, %v2291
    %vm2407 = vcmp.eq.f32.partialorder %v2406, 8.507059e+37
    %v2408 = vand.u32 %v2291, 2147483648
    %v2409 = vor.u32 1.1754944e-38, %v2408
    %v2410 = vsel %vm2407, %v2409, %v2405
    %v2411 = vmul.f32 %v2267, %v2410
    %s2412 = scalar_lea.vmem %s2, 192
    %v2413 = vld [vmem:[%s2412] sm:$0xff]
    %v2414 = vld [vmem:[%s2412 + $0x8] sm:$0xff]
    %v2415 = vld [vmem:[%s2412 + $0x10] sm:$0xff]
    %v2416 = vld [vmem:[%s2412 + $0x18] sm:$0xff]
    %v2418 = vsel %vm97, %v2306, 0
    %v2421 = vsel %vm97, %v2321, 0
    %v2424 = vsel %vm97, %v2336, 0
    %v2427 = vsel %vm97, %v2351, 0
    %v2430 = vsel %vm97, %v2366, 0
    %v2433 = vsel %vm97, %v2381, 0
    %v2436 = vsel %vm97, %v2396, 0
    %v2439 = vsel %vm97, %v2411, 0
    %2441 = vmatpush.msra.mxu0 0.0
    %2442 = vmatpush.msra.mxu0 0.0
    %2443 = vmatpush.msra.mxu0 0.0
    %2444 = vmatpush.msra.mxu0 0.0
    %2445 = vmatpush.msra.mxu0 0.0
    %2446 = vmatpush.msra.mxu0 0.0
    %2447 = vmatpush.msra.mxu0 0.0
    %2448 = vmatpush.msra.mxu0 0.0
    %2449 = vmatpush.msra.mxu0 0.0
    %2450 = vmatpush.msra.mxu0 0.0
    %2451 = vmatpush.msra.mxu0 0.0
    %2452 = vmatpush.msra.mxu0 0.0
    %2453 = vmatpush.msra.mxu0 %v2416
    %2454 = vmatpush.msra.mxu0 %v2415
    %2455 = vmatpush.msra.mxu0 %v2414
    %2456 = vmatpush.msra.mxu0 %v2413
    %2457 = vmatmul.f32.gmra.mxu0 %v2418
    %v2458 = vpop.f32.mrf.mxu0
    %v2459 = vadd.f32 0.0, %v2458
    %2460 = vmatmul.f32.gmra.mxu0 %v2421
    %v2461 = vpop.f32.mrf.mxu0
    %v2462 = vadd.f32 0.0, %v2461
    %2463 = vmatmul.f32.gmra.mxu0 %v2424
    %v2464 = vpop.f32.mrf.mxu0
    %v2465 = vadd.f32 0.0, %v2464
    %2466 = vmatmul.f32.gmra.mxu0 %v2427
    %v2467 = vpop.f32.mrf.mxu0
    %v2468 = vadd.f32 0.0, %v2467
    %2469 = vmatmul.f32.gmra.mxu0 %v2430
    %v2470 = vpop.f32.mrf.mxu0
    %v2471 = vadd.f32 0.0, %v2470
    %2472 = vmatmul.f32.gmra.mxu0 %v2433
    %v2473 = vpop.f32.mrf.mxu0
    %v2474 = vadd.f32 0.0, %v2473
    %2475 = vmatmul.f32.gmra.mxu0 %v2436
    %v2476 = vpop.f32.mrf.mxu0
    %v2477 = vadd.f32 0.0, %v2476
    %2478 = vmatmul.f32.gmra.mxu0 %v2439
    %v2479 = vpop.f32.mrf.mxu0
    %v2480 = vadd.f32 0.0, %v2479
    %2481 = vdwg.mxu0
    %s2482 = scalar_lea.vmem [#allocation2], 384
    %2483 = vst.msk [vmem:[%s2482] sm:$0xff] %vm31, %v2459
    %2484 = vst.msk [vmem:[%s2482 + $0x8] sm:$0xff] %vm31, %v2462
    %2485 = vst.msk [vmem:[%s2482 + $0x10] sm:$0xff] %vm31, %v2465
    %2486 = vst.msk [vmem:[%s2482 + $0x18] sm:$0xff] %vm31, %v2468
    %2487 = vst.msk [vmem:[%s2482 + $0x20] sm:$0xff] %vm31, %v2471
    %2488 = vst.msk [vmem:[%s2482 + $0x28] sm:$0xff] %vm31, %v2474
    %2489 = vst.msk [vmem:[%s2482 + $0x30] sm:$0xff] %vm31, %v2477
    %2490 = vst.msk [vmem:[%s2482 + $0x38] sm:$0xff] %vm31, %v2480
    %s2491 = scalar_lea.vmem %s0, 448
    %v2492 = vld [vmem:[%s2491] sm:$0xff]
    %v2493 = vld [vmem:[%s2491 + $0x8] sm:$0xff]
    %v2494 = vld [vmem:[%s2491 + $0x10] sm:$0xff]
    %v2495 = vld [vmem:[%s2491 + $0x18] sm:$0xff]
    %v2496 = vld [vmem:[%s2491 + $0x20] sm:$0xff]
    %v2497 = vld [vmem:[%s2491 + $0x28] sm:$0xff]
    %v2498 = vld [vmem:[%s2491 + $0x30] sm:$0xff]
    %v2499 = vld [vmem:[%s2491 + $0x38] sm:$0xff]
    %s2500 = scalar_lea.vmem %s1, 448
    %v2501 = vld [vmem:[%s2500] sm:$0xff]
    %v2502 = vld [vmem:[%s2500 + $0x8] sm:$0xff]
    %v2503 = vld [vmem:[%s2500 + $0x10] sm:$0xff]
    %v2504 = vld [vmem:[%s2500 + $0x18] sm:$0xff]
    %v2505 = vld [vmem:[%s2500 + $0x20] sm:$0xff]
    %v2506 = vld [vmem:[%s2500 + $0x28] sm:$0xff]
    %v2507 = vld [vmem:[%s2500 + $0x30] sm:$0xff]
    %v2508 = vld [vmem:[%s2500 + $0x38] sm:$0xff]
    %v2510 = vsel %vm31, %v2492, 0
    %v2513 = vsel %vm31, %v2493, 0
    %v2516 = vsel %vm31, %v2494, 0
    %v2519 = vsel %vm31, %v2495, 0
    %v2522 = vsel %vm31, %v2496, 0
    %v2525 = vsel %vm31, %v2497, 0
    %v2528 = vsel %vm31, %v2498, 0
    %v2531 = vsel %vm31, %v2499, 0
    %2533 = vmatpush.msra.mxu0 0.0
    %2534 = vmatpush.msra.mxu0 0.0
    %2535 = vmatpush.msra.mxu0 0.0
    %2536 = vmatpush.msra.mxu0 0.0
    %2537 = vmatpush.msra.mxu0 0.0
    %2538 = vmatpush.msra.mxu0 0.0
    %2539 = vmatpush.msra.mxu0 0.0
    %2540 = vmatpush.msra.mxu0 0.0
    %2541 = vmatpush.msra.mxu0 %v2508
    %2542 = vmatpush.msra.mxu0 %v2507
    %2543 = vmatpush.msra.mxu0 %v2506
    %2544 = vmatpush.msra.mxu0 %v2505
    %2545 = vmatpush.msra.mxu0 %v2504
    %2546 = vmatpush.msra.mxu0 %v2503
    %2547 = vmatpush.msra.mxu0 %v2502
    %2548 = vmatpush.msra.mxu0 %v2501
    %2549 = vmatmul.f32.gmra.mxu0 %v2510
    %v2550 = vpop.f32.mrf.mxu0
    %v2551 = vadd.f32 0.0, %v2550
    %2552 = vmatmul.f32.gmra.mxu0 %v2513
    %v2553 = vpop.f32.mrf.mxu0
    %v2554 = vadd.f32 0.0, %v2553
    %2555 = vmatmul.f32.gmra.mxu0 %v2516
    %v2556 = vpop.f32.mrf.mxu0
    %v2557 = vadd.f32 0.0, %v2556
    %2558 = vmatmul.f32.gmra.mxu0 %v2519
    %v2559 = vpop.f32.mrf.mxu0
    %v2560 = vadd.f32 0.0, %v2559
    %2561 = vmatmul.f32.gmra.mxu0 %v2522
    %v2562 = vpop.f32.mrf.mxu0
    %v2563 = vadd.f32 0.0, %v2562
    %2564 = vmatmul.f32.gmra.mxu0 %v2525
    %v2565 = vpop.f32.mrf.mxu0
    %v2566 = vadd.f32 0.0, %v2565
    %2567 = vmatmul.f32.gmra.mxu0 %v2528
    %v2568 = vpop.f32.mrf.mxu0
    %v2569 = vadd.f32 0.0, %v2568
    %2570 = vmatmul.f32.gmra.mxu0 %v2531
    %v2571 = vpop.f32.mrf.mxu0
    %v2572 = vadd.f32 0.0, %v2571
    %2573 = vdwg.mxu0
    %v2574 = vsel %vm97, %v2551, -inf
    %2575 = vmax.xlane.f32.xlu0 %v2574
    %v2576 = vpop.xlane.xlu0 %2575
    %v2577 = vsel %vm97, %v2554, -inf
    %2578 = vmax.xlane.f32.xlu0 %v2577
    %v2579 = vpop.xlane.xlu0 %2578
    %v2580 = vsel %vm97, %v2557, -inf
    %2581 = vmax.xlane.f32.xlu0 %v2580
    %v2582 = vpop.xlane.xlu0 %2581
    %v2583 = vsel %vm97, %v2560, -inf
    %2584 = vmax.xlane.f32.xlu0 %v2583
    %v2585 = vpop.xlane.xlu0 %2584
    %v2586 = vsel %vm97, %v2563, -inf
    %2587 = vmax.xlane.f32.xlu0 %v2586
    %v2588 = vpop.xlane.xlu0 %2587
    %v2589 = vsel %vm97, %v2566, -inf
    %2590 = vmax.xlane.f32.xlu0 %v2589
    %v2591 = vpop.xlane.xlu0 %2590
    %v2592 = vsel %vm97, %v2569, -inf
    %2593 = vmax.xlane.f32.xlu0 %v2592
    %v2594 = vpop.xlane.xlu0 %2593
    %v2595 = vsel %vm97, %v2572, -inf
    %2596 = vmax.xlane.f32.xlu0 %v2595
    %v2597 = vpop.xlane.xlu0 %2596
    %v2598 = vsub.f32 %v2551, %v2576
    %v2599 = vsub.f32 %v2554, %v2579
    %v2600 = vsub.f32 %v2557, %v2582
    %v2601 = vsub.f32 %v2560, %v2585
    %v2602 = vsub.f32 %v2563, %v2588
    %v2603 = vsub.f32 %v2566, %v2591
    %v2604 = vsub.f32 %v2569, %v2594
    %v2605 = vsub.f32 %v2572, %v2597
    %v2606 = vmul.f32 %v2598, 1.442695
    %v2607 = vpow.pop %v2606
    %v2608 = vmul.f32 %v2599, 1.442695
    %v2609 = vpow.pop %v2608
    %v2610 = vmul.f32 %v2600, 1.442695
    %v2611 = vpow.pop %v2610
    %v2612 = vmul.f32 %v2601, 1.442695
    %v2613 = vpow.pop %v2612
    %v2614 = vmul.f32 %v2602, 1.442695
    %v2615 = vpow.pop %v2614
    %v2616 = vmul.f32 %v2603, 1.442695
    %v2617 = vpow.pop %v2616
    %v2618 = vmul.f32 %v2604, 1.442695
    %v2619 = vpow.pop %v2618
    %v2620 = vmul.f32 %v2605, 1.442695
    %v2621 = vpow.pop %v2620
    %v2622 = vsel %vm97, %v2607, 0.0
    %2623 = vadd.xlane.f32.xlu0 %v2622
    %v2624 = vpop.xlane.xlu0 %2623
    %v2625 = vsel %vm97, %v2609, 0.0
    %2626 = vadd.xlane.f32.xlu0 %v2625
    %v2627 = vpop.xlane.xlu0 %2626
    %v2628 = vsel %vm97, %v2611, 0.0
    %2629 = vadd.xlane.f32.xlu0 %v2628
    %v2630 = vpop.xlane.xlu0 %2629
    %v2631 = vsel %vm97, %v2613, 0.0
    %2632 = vadd.xlane.f32.xlu0 %v2631
    %v2633 = vpop.xlane.xlu0 %2632
    %v2634 = vsel %vm97, %v2615, 0.0
    %2635 = vadd.xlane.f32.xlu0 %v2634
    %v2636 = vpop.xlane.xlu0 %2635
    %v2637 = vsel %vm97, %v2617, 0.0
    %2638 = vadd.xlane.f32.xlu0 %v2637
    %v2639 = vpop.xlane.xlu0 %2638
    %v2640 = vsel %vm97, %v2619, 0.0
    %2641 = vadd.xlane.f32.xlu0 %v2640
    %v2642 = vpop.xlane.xlu0 %2641
    %v2643 = vsel %vm97, %v2621, 0.0
    %2644 = vadd.xlane.f32.xlu0 %v2643
    %v2645 = vpop.xlane.xlu0 %2644
    %v2646 = vrcp.pop %v2624
    %v2647 = vmul.f32 %v2624, %v2646
    %v2648 = vsub.f32 1.0, %v2647
    %v2649 = vmul.f32 %v2646, %v2648
    %v2650 = vadd.f32 %v2646, %v2649
    %vm2651 = vweird.f32 %v2624
    %vm2652 = vweird.f32 %v2646
    %vm2653 = vmor %vm2651, %vm2652
    %v2654 = vsel %vm2653, %v2646, %v2650
    %v2655 = vand.u32 2147483647, %v2624
    %vm2656 = vcmp.eq.f32.partialorder %v2655, 8.507059e+37
    %v2657 = vand.u32 %v2624, 2147483648
    %v2658 = vor.u32 1.1754944e-38, %v2657
    %v2659 = vsel %vm2656, %v2658, %v2654
    %v2660 = vmul.f32 %v2607, %v2659
    %v2661 = vrcp.pop %v2627
    %v2662 = vmul.f32 %v2627, %v2661
    %v2663 = vsub.f32 1.0, %v2662
    %v2664 = vmul.f32 %v2661, %v2663
    %v2665 = vadd.f32 %v2661, %v2664
    %vm2666 = vweird.f32 %v2627
    %vm2667 = vweird.f32 %v2661
    %vm2668 = vmor %vm2666, %vm2667
    %v2669 = vsel %vm2668, %v2661, %v2665
    %v2670 = vand.u32 2147483647, %v2627
    %vm2671 = vcmp.eq.f32.partialorder %v2670, 8.507059e+37
    %v2672 = vand.u32 %v2627, 2147483648
    %v2673 = vor.u32 1.1754944e-38, %v2672
    %v2674 = vsel %vm2671, %v2673, %v2669
    %v2675 = vmul.f32 %v2609, %v2674
    %v2676 = vrcp.pop %v2630
    %v2677 = vmul.f32 %v2630, %v2676
    %v2678 = vsub.f32 1.0, %v2677
    %v2679 = vmul.f32 %v2676, %v2678
    %v2680 = vadd.f32 %v2676, %v2679
    %vm2681 = vweird.f32 %v2630
    %vm2682 = vweird.f32 %v2676
    %vm2683 = vmor %vm2681, %vm2682
    %v2684 = vsel %vm2683, %v2676, %v2680
    %v2685 = vand.u32 2147483647, %v2630
    %vm2686 = vcmp.eq.f32.partialorder %v2685, 8.507059e+37
    %v2687 = vand.u32 %v2630, 2147483648
    %v2688 = vor.u32 1.1754944e-38, %v2687
    %v2689 = vsel %vm2686, %v2688, %v2684
    %v2690 = vmul.f32 %v2611, %v2689
    %v2691 = vrcp.pop %v2633
    %v2692 = vmul.f32 %v2633, %v2691
    %v2693 = vsub.f32 1.0, %v2692
    %v2694 = vmul.f32 %v2691, %v2693
    %v2695 = vadd.f32 %v2691, %v2694
    %vm2696 = vweird.f32 %v2633
    %vm2697 = vweird.f32 %v2691
    %vm2698 = vmor %vm2696, %vm2697
    %v2699 = vsel %vm2698, %v2691, %v2695
    %v2700 = vand.u32 2147483647, %v2633
    %vm2701 = vcmp.eq.f32.partialorder %v2700, 8.507059e+37
    %v2702 = vand.u32 %v2633, 2147483648
    %v2703 = vor.u32 1.1754944e-38, %v2702
    %v2704 = vsel %vm2701, %v2703, %v2699
    %v2705 = vmul.f32 %v2613, %v2704
    %v2706 = vrcp.pop %v2636
    %v2707 = vmul.f32 %v2636, %v2706
    %v2708 = vsub.f32 1.0, %v2707
    %v2709 = vmul.f32 %v2706, %v2708
    %v2710 = vadd.f32 %v2706, %v2709
    %vm2711 = vweird.f32 %v2636
    %vm2712 = vweird.f32 %v2706
    %vm2713 = vmor %vm2711, %vm2712
    %v2714 = vsel %vm2713, %v2706, %v2710
    %v2715 = vand.u32 2147483647, %v2636
    %vm2716 = vcmp.eq.f32.partialorder %v2715, 8.507059e+37
    %v2717 = vand.u32 %v2636, 2147483648
    %v2718 = vor.u32 1.1754944e-38, %v2717
    %v2719 = vsel %vm2716, %v2718, %v2714
    %v2720 = vmul.f32 %v2615, %v2719
    %v2721 = vrcp.pop %v2639
    %v2722 = vmul.f32 %v2639, %v2721
    %v2723 = vsub.f32 1.0, %v2722
    %v2724 = vmul.f32 %v2721, %v2723
    %v2725 = vadd.f32 %v2721, %v2724
    %vm2726 = vweird.f32 %v2639
    %vm2727 = vweird.f32 %v2721
    %vm2728 = vmor %vm2726, %vm2727
    %v2729 = vsel %vm2728, %v2721, %v2725
    %v2730 = vand.u32 2147483647, %v2639
    %vm2731 = vcmp.eq.f32.partialorder %v2730, 8.507059e+37
    %v2732 = vand.u32 %v2639, 2147483648
    %v2733 = vor.u32 1.1754944e-38, %v2732
    %v2734 = vsel %vm2731, %v2733, %v2729
    %v2735 = vmul.f32 %v2617, %v2734
    %v2736 = vrcp.pop %v2642
    %v2737 = vmul.f32 %v2642, %v2736
    %v2738 = vsub.f32 1.0, %v2737
    %v2739 = vmul.f32 %v2736, %v2738
    %v2740 = vadd.f32 %v2736, %v2739
    %vm2741 = vweird.f32 %v2642
    %vm2742 = vweird.f32 %v2736
    %vm2743 = vmor %vm2741, %vm2742
    %v2744 = vsel %vm2743, %v2736, %v2740
    %v2745 = vand.u32 2147483647, %v2642
    %vm2746 = vcmp.eq.f32.partialorder %v2745, 8.507059e+37
    %v2747 = vand.u32 %v2642, 2147483648
    %v2748 = vor.u32 1.1754944e-38, %v2747
    %v2749 = vsel %vm2746, %v2748, %v2744
    %v2750 = vmul.f32 %v2619, %v2749
    %v2751 = vrcp.pop %v2645
    %v2752 = vmul.f32 %v2645, %v2751
    %v2753 = vsub.f32 1.0, %v2752
    %v2754 = vmul.f32 %v2751, %v2753
    %v2755 = vadd.f32 %v2751, %v2754
    %vm2756 = vweird.f32 %v2645
    %vm2757 = vweird.f32 %v2751
    %vm2758 = vmor %vm2756, %vm2757
    %v2759 = vsel %vm2758, %v2751, %v2755
    %v2760 = vand.u32 2147483647, %v2645
    %vm2761 = vcmp.eq.f32.partialorder %v2760, 8.507059e+37
    %v2762 = vand.u32 %v2645, 2147483648
    %v2763 = vor.u32 1.1754944e-38, %v2762
    %v2764 = vsel %vm2761, %v2763, %v2759
    %v2765 = vmul.f32 %v2621, %v2764
    %s2766 = scalar_lea.vmem %s2, 224
    %v2767 = vld [vmem:[%s2766] sm:$0xff]
    %v2768 = vld [vmem:[%s2766 + $0x8] sm:$0xff]
    %v2769 = vld [vmem:[%s2766 + $0x10] sm:$0xff]
    %v2770 = vld [vmem:[%s2766 + $0x18] sm:$0xff]
    %v2772 = vsel %vm97, %v2660, 0
    %v2775 = vsel %vm97, %v2675, 0
    %v2778 = vsel %vm97, %v2690, 0
    %v2781 = vsel %vm97, %v2705, 0
    %v2784 = vsel %vm97, %v2720, 0
    %v2787 = vsel %vm97, %v2735, 0
    %v2790 = vsel %vm97, %v2750, 0
    %v2793 = vsel %vm97, %v2765, 0
    %2795 = vmatpush.msra.mxu0 0.0
    %2796 = vmatpush.msra.mxu0 0.0
    %2797 = vmatpush.msra.mxu0 0.0
    %2798 = vmatpush.msra.mxu0 0.0
    %2799 = vmatpush.msra.mxu0 0.0
    %2800 = vmatpush.msra.mxu0 0.0
    %2801 = vmatpush.msra.mxu0 0.0
    %2802 = vmatpush.msra.mxu0 0.0
    %2803 = vmatpush.msra.mxu0 0.0
    %2804 = vmatpush.msra.mxu0 0.0
    %2805 = vmatpush.msra.mxu0 0.0
    %2806 = vmatpush.msra.mxu0 0.0
    %2807 = vmatpush.msra.mxu0 %v2770
    %2808 = vmatpush.msra.mxu0 %v2769
    %2809 = vmatpush.msra.mxu0 %v2768
    %2810 = vmatpush.msra.mxu0 %v2767
    %2811 = vmatmul.f32.gmra.mxu0 %v2772
    %v2812 = vpop.f32.mrf.mxu0
    %v2813 = vadd.f32 0.0, %v2812
    %2814 = vmatmul.f32.gmra.mxu0 %v2775
    %v2815 = vpop.f32.mrf.mxu0
    %v2816 = vadd.f32 0.0, %v2815
    %2817 = vmatmul.f32.gmra.mxu0 %v2778
    %v2818 = vpop.f32.mrf.mxu0
    %v2819 = vadd.f32 0.0, %v2818
    %2820 = vmatmul.f32.gmra.mxu0 %v2781
    %v2821 = vpop.f32.mrf.mxu0
    %v2822 = vadd.f32 0.0, %v2821
    %2823 = vmatmul.f32.gmra.mxu0 %v2784
    %v2824 = vpop.f32.mrf.mxu0
    %v2825 = vadd.f32 0.0, %v2824
    %2826 = vmatmul.f32.gmra.mxu0 %v2787
    %v2827 = vpop.f32.mrf.mxu0
    %v2828 = vadd.f32 0.0, %v2827
    %2829 = vmatmul.f32.gmra.mxu0 %v2790
    %v2830 = vpop.f32.mrf.mxu0
    %v2831 = vadd.f32 0.0, %v2830
    %2832 = vmatmul.f32.gmra.mxu0 %v2793
    %v2833 = vpop.f32.mrf.mxu0
    %v2834 = vadd.f32 0.0, %v2833
    %2835 = vdwg.mxu0
    %s2836 = scalar_lea.vmem [#allocation2], 448
    %2837 = vst.msk [vmem:[%s2836] sm:$0xff] %vm31, %v2813
    %2838 = vst.msk [vmem:[%s2836 + $0x8] sm:$0xff] %vm31, %v2816
    %2839 = vst.msk [vmem:[%s2836 + $0x10] sm:$0xff] %vm31, %v2819
    %2840 = vst.msk [vmem:[%s2836 + $0x18] sm:$0xff] %vm31, %v2822
    %2841 = vst.msk [vmem:[%s2836 + $0x20] sm:$0xff] %vm31, %v2825
    %2842 = vst.msk [vmem:[%s2836 + $0x28] sm:$0xff] %vm31, %v2828
    %2843 = vst.msk [vmem:[%s2836 + $0x30] sm:$0xff] %vm31, %v2831
    %2844 = vst.msk [vmem:[%s2836 + $0x38] sm:$0xff] %vm31, %v2834
    // Predicated region
    $region14: #{tpu_custom_call.1} parent=1 // pred_check
      _
    $region15: #{tpu_custom_call.1} parent=1 // pred_check_branch
      %2846 = sbr.rel (0) target = $region17
    $region16: #{tpu_custom_call.1} parent=1 // pred_region
      %2848 = vsyncadd [#allocation3], 0
      %s2849 = sshll.u32 [#allocation2], 4
      %s2850 = int_to_ptr.vmem [resolvable:$true] %s2849
      %s2851 = sshll.u32 %s3, 4
      %s2852 = int_to_ptr.hbm [resolvable:$true] %s2851
      %2857 = dma.vmem_to_hbm [thread:$0]  %s2850, 8192, %s2852, [#allocation3], 128, 128, 8
    $region17: #{tpu_custom_call.1} parent=1 // pred_fallthru
      _
    // Predicated region
    $region18: #{tpu_custom_call.1} parent=1 // pred_check
      _
    $region19: #{tpu_custom_call.1} parent=1 // pred_check_branch
      %2859 = sbr.rel (0) target = $region21
    $region20: #{tpu_custom_call.1} parent=1 // pred_region
      %2861 = dma.done [#allocation3], 8192
    $region21: #{tpu_custom_call.1} parent=1 // pred_fallthru
      _
    %2862 = vsyncpa [#allocation3], 1

</llo_original>
